<compile_context>
chip_gen: v6e
topology: v6e:2x2x1
jax: 0.10.0
libtpu: 0.0.40
codegen_flags: <defaults>
</compile_context>

<pallas_src>
import math
import functools

import numpy as np
import jax
import jax.numpy as jnp
from jax.experimental import pallas as pl
from jax.experimental.pallas import tpu as pltpu


# ------------------------------ Pallas kernel ------------------------------- #
def _fused_extra_conv_kernel(xT_ref, w1_ref, sel_ref, w2_ref, o_ref, g_ref):
    """Fused conv1x1 + ReLU + conv3x3(stride, pad) + ReLU.

    xT_ref : (Cin+1, M)    input (channels on sublanes, positions on lanes),
                           last row = ones (bias-1 fold)
    w1_ref : (Cmid, Cin+1) 1x1 conv weight, last column = b1
    sel_ref: (M, 9*P)      0/1 selection matrix, tap-major along lanes:
                           sel[m, k*P + p] = 1  iff h1 position m feeds tap k
                           of output column p (conv padding / lane padding -> 0)
    w2_ref : (Cout, KC)    3x3 conv weight, column k*Cmid+cm = w2[co,cm,ky,kx],
                           column 9*Cmid = b2, rest zero (lane-dense pad to KC)
    o_ref  : (Cout, P)     output, P a multiple of 128 (lane-dense store)
    g_ref  : (KC, P)       VMEM scratch: stacked gathered taps + bias/zero tail
    """
    Cmid = w1_ref.shape[0]
    P = o_ref.shape[1]
    KC = g_ref.shape[0]
    nt = 9 * Cmid  # 72: rows holding the gathered taps

    # ---- conv 1x1 (+ folded bias) + ReLU; stays on-chip, (Cmid, M) ----
    h1 = jnp.dot(w1_ref[...], xT_ref[...], preferred_element_type=jnp.float32)
    h1 = jnp.maximum(h1, 0.0)

    # ---- spatial gather for all 9 taps in ONE matmul: (Cmid, M) @ (M, 9*P) ----
    g_big = jnp.dot(h1, sel_ref[...], preferred_element_type=jnp.float32)

    # ---- aligned (8, 128) tile copies into the stacked (KC, P) scratch ----
    for k in range(9):  # static unroll; sublane offsets k*Cmid, lane offsets k*P
        g_ref[k * Cmid:(k + 1) * Cmid, :] = g_big[:, k * P:(k + 1) * P]

    # Tail rows: row `nt` = ones (pairs with the b2 column of w2), rest zero
    # (pair with the zero lane-padding columns of w2).
    rid = jax.lax.broadcasted_iota(jnp.int32, (KC - nt, P), 0)
    g_ref[nt:KC, :] = jnp.where(rid == 0, jnp.float32(1.0), jnp.float32(0.0))

    # ---- conv 3x3 (+ folded bias) + ReLU as ONE (Cout, KC) @ (KC, P) matmul ----
    out = jnp.dot(w2_ref[...], g_ref[...], preferred_element_type=jnp.float32)
    o_ref[...] = jnp.maximum(out, 0.0).astype(o_ref.dtype)


# ---------------------- trace-time selection-matrix builder ------------------ #
def _selection_matrix(N, H, W, Ho, Wo, stride, pad, M, P):
    """sel[m, k*P + p] = 1.0 iff flat h1 position m (= n*H*W + iy*W + ix) feeds
    tap k of output column p; conv zero-padding and lane padding columns are 0."""
    Pq = N * Ho * Wo
    sel = np.zeros((M, 9 * P), np.float32)
    p = np.arange(Pq)
    n, r = np.divmod(p, Ho * Wo)
    sy, sx = np.divmod(r, Wo)
    for k in range(9):
        ky, kx = divmod(k, 3)
        iy = sy * stride + ky - pad
        ix = sx * stride + kx - pad
        valid = (iy >= 0) & (iy < H) & (ix >= 0) & (ix < W)
        flat = n * (H * W) + iy * W + ix
        cols = k * P + p
        sel[flat[valid], cols[valid]] = 1.0
    return sel


# ----------------------------- Parameter init ------------------------------- #
def xavier_uniform(key, shape):
    # torch Conv2d weight shape: (out_ch, in_ch, kh, kw)
    out_ch, in_ch, kh, kw = shape
    fan_in = in_ch * kh * kw
    fan_out = out_ch * kh * kw
    bound = math.sqrt(6.0 / (fan_in + fan_out))
    return jax.random.uniform(key, shape, jnp.float32, -bound, bound)


def init_extra_conv_params(key, in_ch, mid_ch, out_ch):
    k1, k2 = jax.random.split(key)
    w1 = xavier_uniform(k1, (mid_ch, in_ch, 1, 1))        # conv1 weight (torch layout)
    b1 = jnp.zeros((mid_ch,), jnp.float32)
    w2 = xavier_uniform(k2, (out_ch, mid_ch, 3, 3))       # conv2 weight (torch layout)
    b2 = jnp.zeros((out_ch,), jnp.float32)
    return dict(w1=w1, b1=b1, w2=w2, b2=b2)


# ------------------------------ Forward pass -------------------------------- #
@functools.partial(jax.jit, static_argnames=("stride", "pad"))
def extra_conv_forward(x_nchw, params, *, stride, pad=0):
    """Equivalent of extra_conv.forward. Input/output are NCHW like PyTorch."""
    w1, b1, w2, b2 = params["w1"], params["b1"], params["w2"], params["b2"]
    N, Cin, H, W = x_nchw.shape
    Cmid = w1.shape[0]
    Cout = w2.shape[0]
    Ho = (H + 2 * pad - 3) // stride + 1
    Wo = (W + 2 * pad - 3) // stride + 1
    M = N * H * W
    Pq = N * Ho * Wo
    P = ((Pq + 127) // 128) * 128              # output columns padded to lane multiple
    KC = ((9 * Cmid + 1 + 127) // 128) * 128   # final contraction dim, lane-dense

    # Layout plumbing (tiny, host/XLA side): channels -> sublanes, flattened
    # (n, y, x) positions -> lanes; biases folded into the weight operands.
    xT = jnp.transpose(x_nchw, (1, 0, 2, 3)).reshape(Cin, M)                   # (Cin, M)
    xT_aug = jnp.concatenate([xT, jnp.ones((1, M), jnp.float32)], axis=0)      # (Cin+1, M)
    w1_aug = jnp.concatenate([w1.reshape(Cmid, Cin),
                              b1.reshape(Cmid, 1)], axis=1)                    # (Cmid, Cin+1)

    w2_tap = jnp.transpose(w2, (0, 2, 3, 1)).reshape(Cout, 9 * Cmid)           # [co,(ky,kx,cm)]
    w2_pad = jnp.zeros((Cout, KC), jnp.float32)
    w2_pad = w2_pad.at[:, :9 * Cmid].set(w2_tap)
    w2_pad = w2_pad.at[:, 9 * Cmid].set(b2)                                    # b2 column

    sel = jnp.asarray(_selection_matrix(N, H, W, Ho, Wo, stride, pad, M, P))   # (M, 9P) f32

    flops = (2 * Cmid * (Cin + 1) * M          # conv1x1
             + 2 * Cmid * M * 9 * P            # fused gather matmul
             + 2 * Cout * KC * P)              # fused conv3x3 matmul
    bytes_accessed = 4 * ((Cin + 1) * M + Cmid * (Cin + 1)
                          + M * 9 * P + Cout * KC + Cout * P)

    outT = pl.pallas_call(
        _fused_extra_conv_kernel,
        out_shape=jax.ShapeDtypeStruct((Cout, P), jnp.float32),
        # No grid / BlockSpecs: the whole (tiny) operands are VMEM resident in a
        # single invocation -> no per-step pipeline overhead, no HBM round trip.
        scratch_shapes=[pltpu.VMEM((KC, P), jnp.float32)],
        compiler_params=pltpu.CompilerParams(vmem_limit_bytes=32 * 1024 * 1024),
        cost_estimate=pl.CostEstimate(flops=flops, transcendentals=0,
                                      bytes_accessed=bytes_accessed),
    )(xT_aug, w1_aug, sel, w2_pad)

    out = outT[:, :Pq].reshape(Cout, N, Ho, Wo)      # drop lane padding
    return jnp.transpose(out, (1, 0, 2, 3))          # -> NCHW


# ------------------------------ Reference (check) --------------------------- #
def reference_forward(x_nchw, params, *, stride, pad=0):
    dn = jax.lax.conv_dimension_numbers(x_nchw.shape, params["w1"].shape,
                                        ("NCHW", "OIHW", "NCHW"))
    h = jax.lax.conv_general_dilated(x_nchw, params["w1"], (1, 1), "VALID",
                                     dimension_numbers=dn)
    h = jax.nn.relu(h + params["b1"][None, :, None, None])
    o = jax.lax.conv_general_dilated(h, params["w2"], (stride, stride),
                                     [(pad, pad), (pad, pad)],
                                     dimension_numbers=dn)
    return jax.nn.relu(o + params["b2"][None, :, None, None])


# ----------------------------------- Main ----------------------------------- #
if __name__ == "__main__":
    key = jax.random.PRNGKey(0)
    kx, kp = jax.random.split(key)

    in_ch, mid_ch, out_ch = 4, 8, 16
    stride, pad = 2, 0
    N, H, W = 2, 16, 16

    x = jax.random.normal(kx, (N, in_ch, H, W), jnp.float32)    # NCHW like PyTorch
    params = init_extra_conv_params(kp, in_ch, mid_ch, out_ch)

    out = extra_conv_forward(x, params, stride=stride, pad=pad)
    out = jax.block_until_ready(out)

    ref = reference_forward(x, params, stride=stride, pad=pad)
    assert out.shape == ref.shape, (out.shape, ref.shape)
    assert jnp.allclose(out, ref, atol=1e-5, rtol=1e-5), "mismatch vs reference"

    print("KERNEL_OK")
</pallas_src>

<mosaic_0001>
module attributes {stable_mosaic.version = 11 : i64} {
  func.func @_fused_extra_conv_kernel(%arg0: memref<5x512xf32, #tpu.memory_space<vmem>>, %arg1: memref<8x5xf32, #tpu.memory_space<vmem>>, %arg2: memref<512x1152xf32, #tpu.memory_space<vmem>>, %arg3: memref<16x128xf32, #tpu.memory_space<vmem>>, %arg4: memref<16x128xf32, #tpu.memory_space<vmem>>, %arg5: memref<128x128xf32, #tpu.memory_space<vmem>>) attributes {dimension_semantics = [], scalar_prefetch = 0 : i64, scratch_operands = 1 : i64, tpu.core_type = #tpu.core_type<tc>} {
    %c0 = arith.constant 0 : index
    %c0_0 = arith.constant 0 : index
    %0 = vector.load %arg1[%c0, %c0_0] : memref<8x5xf32, #tpu.memory_space<vmem>>, vector<8x5xf32>
    %c0_1 = arith.constant 0 : index
    %c0_2 = arith.constant 0 : index
    %1 = vector.load %arg0[%c0_1, %c0_2] : memref<5x512xf32, #tpu.memory_space<vmem>>, vector<5x512xf32>
    %cst = arith.constant dense<0.000000e+00> : vector<8x512xf32>
    %2 = tpu.matmul %0, %1, %cst {dimension_numbers = #tpu.dot_dimension_numbers<[1], [0], [0], [1], [0, 0, 1, 1], [], []>} : vector<8x5xf32>, vector<5x512xf32>, vector<8x512xf32> -> vector<8x512xf32>
    %cst_3 = arith.constant 0.000000e+00 : f32
    %3 = vector.broadcast %cst_3 : f32 to vector<8x512xf32>
    %4 = arith.maximumf %2, %3 : vector<8x512xf32>
    %c0_4 = arith.constant 0 : index
    %c0_5 = arith.constant 0 : index
    %5 = vector.load %arg2[%c0_4, %c0_5] : memref<512x1152xf32, #tpu.memory_space<vmem>>, vector<512x1152xf32>
    %cst_6 = arith.constant dense<0.000000e+00> : vector<8x1152xf32>
    %6 = tpu.matmul %4, %5, %cst_6 {dimension_numbers = #tpu.dot_dimension_numbers<[1], [0], [0], [1], [0, 0, 1, 1], [], []>} : vector<8x512xf32>, vector<512x1152xf32>, vector<8x1152xf32> -> vector<8x1152xf32>
    %7 = vector.extract_strided_slice %6 {offsets = [0, 0], sizes = [8, 128], strides = [1, 1]} : vector<8x1152xf32> to vector<8x128xf32>
    %c0_7 = arith.constant 0 : index
    %c0_8 = arith.constant 0 : index
    %8 = vector.load %arg5[%c0_7, %c0_8] : memref<128x128xf32, #tpu.memory_space<vmem>>, vector<8x128xf32>
    tpu.vector_store %arg5[%c0_7, %c0_8], %7 {strides = array<i32>} : memref<128x128xf32, #tpu.memory_space<vmem>>, vector<8x128xf32>,
    %9 = vector.extract_strided_slice %6 {offsets = [0, 128], sizes = [8, 128], strides = [1, 1]} : vector<8x1152xf32> to vector<8x128xf32>
    %c8 = arith.constant 8 : index
    %c0_9 = arith.constant 0 : index
    %10 = vector.load %arg5[%c8, %c0_9] : memref<128x128xf32, #tpu.memory_space<vmem>>, vector<8x128xf32>
    tpu.vector_store %arg5[%c8, %c0_9], %9 {strides = array<i32>} : memref<128x128xf32, #tpu.memory_space<vmem>>, vector<8x128xf32>,
    %11 = vector.extract_strided_slice %6 {offsets = [0, 256], sizes = [8, 128], strides = [1, 1]} : vector<8x1152xf32> to vector<8x128xf32>
    %c16 = arith.constant 16 : index
    %c0_10 = arith.constant 0 : index
    %12 = vector.load %arg5[%c16, %c0_10] : memref<128x128xf32, #tpu.memory_space<vmem>>, vector<8x128xf32>
    tpu.vector_store %arg5[%c16, %c0_10], %11 {strides = array<i32>} : memref<128x128xf32, #tpu.memory_space<vmem>>, vector<8x128xf32>,
    %13 = vector.extract_strided_slice %6 {offsets = [0, 384], sizes = [8, 128], strides = [1, 1]} : vector<8x1152xf32> to vector<8x128xf32>
    %c24 = arith.constant 24 : index
    %c0_11 = arith.constant 0 : index
    %14 = vector.load %arg5[%c24, %c0_11] : memref<128x128xf32, #tpu.memory_space<vmem>>, vector<8x128xf32>
    tpu.vector_store %arg5[%c24, %c0_11], %13 {strides = array<i32>} : memref<128x128xf32, #tpu.memory_space<vmem>>, vector<8x128xf32>,
    %15 = vector.extract_strided_slice %6 {offsets = [0, 512], sizes = [8, 128], strides = [1, 1]} : vector<8x1152xf32> to vector<8x128xf32>
    %c32 = arith.constant 32 : index
    %c0_12 = arith.constant 0 : index
    %16 = vector.load %arg5[%c32, %c0_12] : memref<128x128xf32, #tpu.memory_space<vmem>>, vector<8x128xf32>
    tpu.vector_store %arg5[%c32, %c0_12], %15 {strides = array<i32>} : memref<128x128xf32, #tpu.memory_space<vmem>>, vector<8x128xf32>,
    %17 = vector.extract_strided_slice %6 {offsets = [0, 640], sizes = [8, 128], strides = [1, 1]} : vector<8x1152xf32> to vector<8x128xf32>
    %c40 = arith.constant 40 : index
    %c0_13 = arith.constant 0 : index
    %18 = vector.load %arg5[%c40, %c0_13] : memref<128x128xf32, #tpu.memory_space<vmem>>, vector<8x128xf32>
    tpu.vector_store %arg5[%c40, %c0_13], %17 {strides = array<i32>} : memref<128x128xf32, #tpu.memory_space<vmem>>, vector<8x128xf32>,
    %19 = vector.extract_strided_slice %6 {offsets = [0, 768], sizes = [8, 128], strides = [1, 1]} : vector<8x1152xf32> to vector<8x128xf32>
    %c48 = arith.constant 48 : index
    %c0_14 = arith.constant 0 : index
    %20 = vector.load %arg5[%c48, %c0_14] : memref<128x128xf32, #tpu.memory_space<vmem>>, vector<8x128xf32>
    tpu.vector_store %arg5[%c48, %c0_14], %19 {strides = array<i32>} : memref<128x128xf32, #tpu.memory_space<vmem>>, vector<8x128xf32>,
    %21 = vector.extract_strided_slice %6 {offsets = [0, 896], sizes = [8, 128], strides = [1, 1]} : vector<8x1152xf32> to vector<8x128xf32>
    %c56 = arith.constant 56 : index
    %c0_15 = arith.constant 0 : index
    %22 = vector.load %arg5[%c56, %c0_15] : memref<128x128xf32, #tpu.memory_space<vmem>>, vector<8x128xf32>
    tpu.vector_store %arg5[%c56, %c0_15], %21 {strides = array<i32>} : memref<128x128xf32, #tpu.memory_space<vmem>>, vector<8x128xf32>,
    %23 = vector.extract_strided_slice %6 {offsets = [0, 1024], sizes = [8, 128], strides = [1, 1]} : vector<8x1152xf32> to vector<8x128xf32>
    %c64 = arith.constant 64 : index
    %c0_16 = arith.constant 0 : index
    %24 = vector.load %arg5[%c64, %c0_16] : memref<128x128xf32, #tpu.memory_space<vmem>>, vector<8x128xf32>
    tpu.vector_store %arg5[%c64, %c0_16], %23 {strides = array<i32>} : memref<128x128xf32, #tpu.memory_space<vmem>>, vector<8x128xf32>,
    %25 = tpu.iota {dimensions = array<i32: 0>} : vector<56x128xi32>
    %c0_i32 = arith.constant 0 : i32
    %26 = vector.broadcast %c0_i32 : i32 to vector<56x128xi32>
    %27 = arith.cmpi eq, %25, %26 : vector<56x128xi32>
    %cst_17 = arith.constant 1.000000e+00 : f32
    %cst_18 = arith.constant 0.000000e+00 : f32
    %28 = vector.broadcast %cst_17 : f32 to vector<56x128xf32>
    %29 = vector.broadcast %cst_18 : f32 to vector<56x128xf32>
    %30 = arith.select %27, %28, %29 : vector<56x128xi1>, vector<56x128xf32>
    %c72 = arith.constant 72 : index
    %c0_19 = arith.constant 0 : index
    %31 = vector.load %arg5[%c72, %c0_19] : memref<128x128xf32, #tpu.memory_space<vmem>>, vector<56x128xf32>
    tpu.vector_store %arg5[%c72, %c0_19], %30 {strides = array<i32>} : memref<128x128xf32, #tpu.memory_space<vmem>>, vector<56x128xf32>,
    %c0_20 = arith.constant 0 : index
    %c0_21 = arith.constant 0 : index
    %32 = vector.load %arg3[%c0_20, %c0_21] : memref<16x128xf32, #tpu.memory_space<vmem>>, vector<16x128xf32>
    %c0_22 = arith.constant 0 : index
    %c0_23 = arith.constant 0 : index
    %33 = vector.load %arg5[%c0_22, %c0_23] : memref<128x128xf32, #tpu.memory_space<vmem>>, vector<128x128xf32>
    %cst_24 = arith.constant dense<0.000000e+00> : vector<16x128xf32>
    %34 = tpu.matmul %32, %33, %cst_24 {dimension_numbers = #tpu.dot_dimension_numbers<[1], [0], [0], [1], [0, 0, 1, 1], [], []>} : vector<16x128xf32>, vector<128x128xf32>, vector<16x128xf32> -> vector<16x128xf32>
    %cst_25 = arith.constant 0.000000e+00 : f32
    %35 = vector.broadcast %cst_25 : f32 to vector<16x128xf32>
    %36 = arith.maximumf %34, %35 : vector<16x128xf32>
    %c0_26 = arith.constant 0 : index
    %c0_27 = arith.constant 0 : index
    %37 = vector.load %arg4[%c0_26, %c0_27] : memref<16x128xf32, #tpu.memory_space<vmem>>, vector<16x128xf32>
    tpu.vector_store %arg4[%c0_26, %c0_27], %36 {strides = array<i32>} : memref<16x128xf32, #tpu.memory_space<vmem>>, vector<16x128xf32>,
    return
  }
}

</mosaic_0001>

<llo_original>
// kernel: extra_conv_forward.1
$region0: #{extra_conv_forward.1}
  #allocation0 [shape = 'u32[]', space=smem, size = 0x4, offset = 0x4, fixed_abs, tag = 'smem constant byte address 0x4 - core index']
  #allocation1 [shape = 'u32[144,128]{1,0:T(1,128)}', space=vmem, size = 0x12000, scoped, tag = 'internal scratch']
  #allocation2 [shape = 'f32[128,128]{1,0:T(8,128)}', space=vmem, size = 0x10000, scoped, tag = 'scratch operand']
  %s0 = inlined_call_operand.vmem [shape: f32[5,512], index: 0, kind: input, shape index: {}]
  %s1 = inlined_call_operand.vmem [shape: f32[8,5], index: 1, kind: input, shape index: {}]
  %s2 = inlined_call_operand.hbm [shape: f32[512,1152], index: 2, kind: input, shape index: {}]
  %s3 = inlined_call_operand.vmem [shape: f32[16,128], index: 3, kind: input, shape index: {}]
  %s4 = inlined_call_operand.vmem [shape: f32[16,128], index: 4, kind: output, shape index: {}]
  %s5 = sld [smem:[#allocation0]]
  $region30: #{extra_conv_forward.1} parent=0
    _
  %s7 = ssub.s32 1, %s5
  %s8 = scalar_select 0, %s7, %s5
  $region1: #{extra_conv_forward.1} parent=0
    #allocation3 [shape = 'u8[2359296]{0}', space=vmem, size = 0x240000, scoped, tag = 'input window, operand 2, single buffered']
    #allocation4 [shape = 's32[1]{0}', space=sflag, size = 0x4, scoped, tag = 'scoped memory for extra_conv_forward.1']
    %9 = vsyncpa [#allocation4], 0
    // Predicated region
    $region2: #{extra_conv_forward.1} parent=1 // pred_check
      _
    $region3: #{extra_conv_forward.1} parent=1 // pred_check_branch
      %11 = sbr.rel (0) target = $region5
    $region4: #{extra_conv_forward.1} parent=1 // pred_region
      _
    $region5: #{extra_conv_forward.1} parent=1 // pred_fallthru
      _
    // Predicated region
    $region6: #{extra_conv_forward.1} parent=1 // pred_check
      _
    $region7: #{extra_conv_forward.1} parent=1 // pred_check_branch
      %13 = sbr.rel (0) target = $region9
    $region8: #{extra_conv_forward.1} parent=1 // pred_region
      _
    $region9: #{extra_conv_forward.1} parent=1 // pred_fallthru
      _
    // Predicated region
    $region10: #{extra_conv_forward.1} parent=1 // pred_check
      _
    $region11: #{extra_conv_forward.1} parent=1 // pred_check_branch
      %15 = sbr.rel (0) target = $region13
    $region12: #{extra_conv_forward.1} parent=1 // pred_region
      %s17 = ssub.s32 73728, 73728
      %18 = vsyncadd [#allocation4], %s17
      %s19 = sshll.u32 [#allocation3], 4
      %s20 = int_to_ptr.vmem [resolvable:$true] %s19
      %25 = dma.hbm_to_vmem [thread:$0]  %s2, 73728, %s20, [#allocation4], 1152, 1152, 72
    $region13: #{extra_conv_forward.1} parent=1 // pred_fallthru
      _
    // Predicated region
    $region14: #{extra_conv_forward.1} parent=1 // pred_check
      _
    $region15: #{extra_conv_forward.1} parent=1 // pred_check_branch
      %27 = sbr.rel (0) target = $region17
    $region16: #{extra_conv_forward.1} parent=1 // pred_region
      _
    $region17: #{extra_conv_forward.1} parent=1 // pred_fallthru
      _
    // Predicated region
    $region18: #{extra_conv_forward.1} parent=1 // pred_check
      _
    $region19: #{extra_conv_forward.1} parent=1 // pred_check_branch
      %29 = sbr.rel (0) target = $region21
    $region20: #{extra_conv_forward.1} parent=1 // pred_region
      %30 = dma.done [#allocation4], 73728
    $region21: #{extra_conv_forward.1} parent=1 // pred_fallthru
      _
    %v31 = vld [vmem:[%s1] sm:$0xff]
    %v32 = vld [vmem:[%s0] sm:$0x1f]
    %v33 = vld [vmem:[%s0 + $0x8] sm:$0x1f]
    %v34 = vld [vmem:[%s0 + $0x10] sm:$0x1f]
    %v35 = vld [vmem:[%s0 + $0x18] sm:$0x1f]
    %vm36 = vcmask 39936
    %v38 = vsel %vm36, %v31, 0
    %vm40 = vcmask 1044480
    %v42 = vsel %vm40, %v32, 0
    %v45 = vsel %vm40, %v33, 0
    %v48 = vsel %vm40, %v34, 0
    %v51 = vsel %vm40, %v35, 0
    %53 = vmatprep.subr.mxu0 0.0
    %54 = vmatpush1.msra.mxu0 0.0
    %55 = vmatprep.subr.mxu0 0.0
    %56 = vmatpush1.msra.mxu0 0.0
    %57 = vmatprep.subr.mxu0 0.0
    %58 = vmatpush1.msra.mxu0 0.0
    %59 = vmatprep.subr.mxu0 0.0
    %60 = vmatpush1.msra.mxu0 0.0
    %61 = vmatprep.subr.mxu0 0.0
    %62 = vmatpush1.msra.mxu0 0.0
    %63 = vmatprep.subr.mxu0 0.0
    %64 = vmatpush1.msra.mxu0 0.0
    %65 = vmatprep.subr.mxu0 0.0
    %66 = vmatpush1.msra.mxu0 0.0
    %67 = vmatprep.subr.mxu0 0.0
    %68 = vmatpush1.msra.mxu0 0.0
    %69 = vmatprep.subr.mxu0 0.0
    %70 = vmatpush1.msra.mxu0 0.0
    %71 = vmatprep.subr.mxu0 0.0
    %72 = vmatpush1.msra.mxu0 0.0
    %73 = vmatprep.subr.mxu0 0.0
    %74 = vmatpush1.msra.mxu0 0.0
    %75 = vmatprep.subr.mxu0 0.0
    %76 = vmatpush1.msra.mxu0 0.0
    %77 = vmatprep.subr.mxu0 0.0
    %78 = vmatpush1.msra.mxu0 0.0
    %79 = vmatprep.subr.mxu0 0.0
    %80 = vmatpush1.msra.mxu0 0.0
    %81 = vmatprep.subr.mxu0 0.0
    %82 = vmatpush1.msra.mxu0 0.0
    %83 = vmatprep.subr.mxu0 %v45
    %84 = vmatpush1.msra.mxu0 %v42
    %85 = vmatprep.subr.mxu0 0.0
    %86 = vmatpush2.msra.mxu0 0.0
    %87 = vmatprep.subr.mxu0 0.0
    %88 = vmatpush2.msra.mxu0 0.0
    %89 = vmatprep.subr.mxu0 0.0
    %90 = vmatpush2.msra.mxu0 0.0
    %91 = vmatprep.subr.mxu0 0.0
    %92 = vmatpush2.msra.mxu0 0.0
    %93 = vmatprep.subr.mxu0 0.0
    %94 = vmatpush2.msra.mxu0 0.0
    %95 = vmatprep.subr.mxu0 0.0
    %96 = vmatpush2.msra.mxu0 0.0
    %97 = vmatprep.subr.mxu0 0.0
    %98 = vmatpush2.msra.mxu0 0.0
    %99 = vmatprep.subr.mxu0 0.0
    %100 = vmatpush2.msra.mxu0 0.0
    %101 = vmatprep.subr.mxu0 0.0
    %102 = vmatpush2.msra.mxu0 0.0
    %103 = vmatprep.subr.mxu0 0.0
    %104 = vmatpush2.msra.mxu0 0.0
    %105 = vmatprep.subr.mxu0 0.0
    %106 = vmatpush2.msra.mxu0 0.0
    %107 = vmatprep.subr.mxu0 0.0
    %108 = vmatpush2.msra.mxu0 0.0
    %109 = vmatprep.subr.mxu0 0.0
    %110 = vmatpush2.msra.mxu0 0.0
    %111 = vmatprep.subr.mxu0 0.0
    %112 = vmatpush2.msra.mxu0 0.0
    %113 = vmatprep.subr.mxu0 0.0
    %114 = vmatpush2.msra.mxu0 0.0
    %115 = vmatprep.subr.mxu0 0.0
    %116 = vmatpush2.msra.mxu0 0.0
    %117 = vmatprep.mubr.f32.mxu0 0.0
    %118 = vmatmul.mubr.f32.gmra.mxu0 %v38
    %v119 = vpop.f32.mrf.mxu0
    %v120 = vadd.f32 0.0, %v119
    %v121 = vpop.f32.mrf.mxu0
    %v122 = vadd.f32 0.0, %v121
    %123 = vdwg.mxu0
    %124 = vmatprep.subr.mxu0 0.0
    %125 = vmatpush1.msra.mxu0 0.0
    %126 = vmatprep.subr.mxu0 0.0
    %127 = vmatpush1.msra.mxu0 0.0
    %128 = vmatprep.subr.mxu0 0.0
    %129 = vmatpush1.msra.mxu0 0.0
    %130 = vmatprep.subr.mxu0 0.0
    %131 = vmatpush1.msra.mxu0 0.0
    %132 = vmatprep.subr.mxu0 0.0
    %133 = vmatpush1.msra.mxu0 0.0
    %134 = vmatprep.subr.mxu0 0.0
    %135 = vmatpush1.msra.mxu0 0.0
    %136 = vmatprep.subr.mxu0 0.0
    %137 = vmatpush1.msra.mxu0 0.0
    %138 = vmatprep.subr.mxu0 0.0
    %139 = vmatpush1.msra.mxu0 0.0
    %140 = vmatprep.subr.mxu0 0.0
    %141 = vmatpush1.msra.mxu0 0.0
    %142 = vmatprep.subr.mxu0 0.0
    %143 = vmatpush1.msra.mxu0 0.0
    %144 = vmatprep.subr.mxu0 0.0
    %145 = vmatpush1.msra.mxu0 0.0
    %146 = vmatprep.subr.mxu0 0.0
    %147 = vmatpush1.msra.mxu0 0.0
    %148 = vmatprep.subr.mxu0 0.0
    %149 = vmatpush1.msra.mxu0 0.0
    %150 = vmatprep.subr.mxu0 0.0
    %151 = vmatpush1.msra.mxu0 0.0
    %152 = vmatprep.subr.mxu0 0.0
    %153 = vmatpush1.msra.mxu0 0.0
    %154 = vmatprep.subr.mxu0 %v51
    %155 = vmatpush1.msra.mxu0 %v48
    %156 = vmatprep.subr.mxu0 0.0
    %157 = vmatpush2.msra.mxu0 0.0
    %158 = vmatprep.subr.mxu0 0.0
    %159 = vmatpush2.msra.mxu0 0.0
    %160 = vmatprep.subr.mxu0 0.0
    %161 = vmatpush2.msra.mxu0 0.0
    %162 = vmatprep.subr.mxu0 0.0
    %163 = vmatpush2.msra.mxu0 0.0
    %164 = vmatprep.subr.mxu0 0.0
    %165 = vmatpush2.msra.mxu0 0.0
    %166 = vmatprep.subr.mxu0 0.0
    %167 = vmatpush2.msra.mxu0 0.0
    %168 = vmatprep.subr.mxu0 0.0
    %169 = vmatpush2.msra.mxu0 0.0
    %170 = vmatprep.subr.mxu0 0.0
    %171 = vmatpush2.msra.mxu0 0.0
    %172 = vmatprep.subr.mxu0 0.0
    %173 = vmatpush2.msra.mxu0 0.0
    %174 = vmatprep.subr.mxu0 0.0
    %175 = vmatpush2.msra.mxu0 0.0
    %176 = vmatprep.subr.mxu0 0.0
    %177 = vmatpush2.msra.mxu0 0.0
    %178 = vmatprep.subr.mxu0 0.0
    %179 = vmatpush2.msra.mxu0 0.0
    %180 = vmatprep.subr.mxu0 0.0
    %181 = vmatpush2.msra.mxu0 0.0
    %182 = vmatprep.subr.mxu0 0.0
    %183 = vmatpush2.msra.mxu0 0.0
    %184 = vmatprep.subr.mxu0 0.0
    %185 = vmatpush2.msra.mxu0 0.0
    %186 = vmatprep.subr.mxu0 0.0
    %187 = vmatpush2.msra.mxu0 0.0
    %188 = vmatprep.mubr.f32.mxu0 0.0
    %189 = vmatmul.mubr.f32.gmra.mxu0 %v38
    %v190 = vpop.f32.mrf.mxu0
    %v191 = vadd.f32 0.0, %v190
    %v192 = vpop.f32.mrf.mxu0
    %v193 = vadd.f32 0.0, %v192
    %194 = vdwg.mxu0
    %v195 = vmax.f32 %v120, 0.0
    %v196 = vmax.f32 %v122, 0.0
    %v197 = vmax.f32 %v191, 0.0
    %v198 = vmax.f32 %v193, 0.0
    %v199 = vld [vmem:[#allocation3] sm:$0xff]
    %v200 = vld [vmem:[#allocation3 + $0x8] sm:$0xff]
    %v201 = vld [vmem:[#allocation3 + $0x10] sm:$0xff]
    %v202 = vld [vmem:[#allocation3 + $0x18] sm:$0xff]
    %v203 = vld [vmem:[#allocation3 + $0x20] sm:$0xff]
    %v204 = vld [vmem:[#allocation3 + $0x28] sm:$0xff]
    %v205 = vld [vmem:[#allocation3 + $0x30] sm:$0xff]
    %v206 = vld [vmem:[#allocation3 + $0x38] sm:$0xff]
    %v207 = vld [vmem:[#allocation3 + $0x40] sm:$0xff]
    %v208 = vld [vmem:[#allocation3 + $0x48] sm:$0xff]
    %v209 = vld [vmem:[#allocation3 + $0x50] sm:$0xff]
    %v210 = vld [vmem:[#allocation3 + $0x58] sm:$0xff]
    %v211 = vld [vmem:[#allocation3 + $0x60] sm:$0xff]
    %v212 = vld [vmem:[#allocation3 + $0x68] sm:$0xff]
    %v213 = vld [vmem:[#allocation3 + $0x70] sm:$0xff]
    %v214 = vld [vmem:[#allocation3 + $0x78] sm:$0xff]
    %v215 = vld [vmem:[#allocation3 + $0x80] sm:$0xff]
    %v216 = vld [vmem:[#allocation3 + $0x88] sm:$0xff]
    %v217 = vld [vmem:[#allocation3 + $0x90] sm:$0xff]
    %v218 = vld [vmem:[#allocation3 + $0x98] sm:$0xff]
    %v219 = vld [vmem:[#allocation3 + $0xa0] sm:$0xff]
    %v220 = vld [vmem:[#allocation3 + $0xa8] sm:$0xff]
    %v221 = vld [vmem:[#allocation3 + $0xb0] sm:$0xff]
    %v222 = vld [vmem:[#allocation3 + $0xb8] sm:$0xff]
    %v223 = vld [vmem:[#allocation3 + $0xc0] sm:$0xff]
    %v224 = vld [vmem:[#allocation3 + $0xc8] sm:$0xff]
    %v225 = vld [vmem:[#allocation3 + $0xd0] sm:$0xff]
    %v226 = vld [vmem:[#allocation3 + $0xd8] sm:$0xff]
    %v227 = vld [vmem:[#allocation3 + $0xe0] sm:$0xff]
    %v228 = vld [vmem:[#allocation3 + $0xe8] sm:$0xff]
    %v229 = vld [vmem:[#allocation3 + $0xf0] sm:$0xff]
    %v230 = vld [vmem:[#allocation3 + $0xf8] sm:$0xff]
    %v231 = vld [vmem:[#allocation3 + $0x100] sm:$0xff]
    %v232 = vld [vmem:[#allocation3 + $0x108] sm:$0xff]
    %v233 = vld [vmem:[#allocation3 + $0x110] sm:$0xff]
    %v234 = vld [vmem:[#allocation3 + $0x118] sm:$0xff]
    %v235 = vld [vmem:[#allocation3 + $0x120] sm:$0xff]
    %v236 = vld [vmem:[#allocation3 + $0x128] sm:$0xff]
    %v237 = vld [vmem:[#allocation3 + $0x130] sm:$0xff]
    %v238 = vld [vmem:[#allocation3 + $0x138] sm:$0xff]
    %v239 = vld [vmem:[#allocation3 + $0x140] sm:$0xff]
    %v240 = vld [vmem:[#allocation3 + $0x148] sm:$0xff]
    %v241 = vld [vmem:[#allocation3 + $0x150] sm:$0xff]
    %v242 = vld [vmem:[#allocation3 + $0x158] sm:$0xff]
    %v243 = vld [vmem:[#allocation3 + $0x160] sm:$0xff]
    %v244 = vld [vmem:[#allocation3 + $0x168] sm:$0xff]
    %v245 = vld [vmem:[#allocation3 + $0x170] sm:$0xff]
    %v246 = vld [vmem:[#allocation3 + $0x178] sm:$0xff]
    %v247 = vld [vmem:[#allocation3 + $0x180] sm:$0xff]
    %v248 = vld [vmem:[#allocation3 + $0x188] sm:$0xff]
    %v249 = vld [vmem:[#allocation3 + $0x190] sm:$0xff]
    %v250 = vld [vmem:[#allocation3 + $0x198] sm:$0xff]
    %v251 = vld [vmem:[#allocation3 + $0x1a0] sm:$0xff]
    %v252 = vld [vmem:[#allocation3 + $0x1a8] sm:$0xff]
    %v253 = vld [vmem:[#allocation3 + $0x1b0] sm:$0xff]
    %v254 = vld [vmem:[#allocation3 + $0x1b8] sm:$0xff]
    %v255 = vld [vmem:[#allocation3 + $0x1c0] sm:$0xff]
    %v256 = vld [vmem:[#allocation3 + $0x1c8] sm:$0xff]
    %v257 = vld [vmem:[#allocation3 + $0x1d0] sm:$0xff]
    %v258 = vld [vmem:[#allocation3 + $0x1d8] sm:$0xff]
    %v259 = vld [vmem:[#allocation3 + $0x1e0] sm:$0xff]
    %v260 = vld [vmem:[#allocation3 + $0x1e8] sm:$0xff]
    %v261 = vld [vmem:[#allocation3 + $0x1f0] sm:$0xff]
    %v262 = vld [vmem:[#allocation3 + $0x1f8] sm:$0xff]
    %v263 = vld [vmem:[#allocation3 + $0x200] sm:$0xff]
    %v264 = vld [vmem:[#allocation3 + $0x208] sm:$0xff]
    %v265 = vld [vmem:[#allocation3 + $0x210] sm:$0xff]
    %v266 = vld [vmem:[#allocation3 + $0x218] sm:$0xff]
    %v267 = vld [vmem:[#allocation3 + $0x220] sm:$0xff]
    %v268 = vld [vmem:[#allocation3 + $0x228] sm:$0xff]
    %v269 = vld [vmem:[#allocation3 + $0x230] sm:$0xff]
    %v270 = vld [vmem:[#allocation3 + $0x238] sm:$0xff]
    %v271 = vld [vmem:[#allocation3 + $0x240] sm:$0xff]
    %v272 = vld [vmem:[#allocation3 + $0x248] sm:$0xff]
    %v273 = vld [vmem:[#allocation3 + $0x250] sm:$0xff]
    %v274 = vld [vmem:[#allocation3 + $0x258] sm:$0xff]
    %v275 = vld [vmem:[#allocation3 + $0x260] sm:$0xff]
    %v276 = vld [vmem:[#allocation3 + $0x268] sm:$0xff]
    %v277 = vld [vmem:[#allocation3 + $0x270] sm:$0xff]
    %v278 = vld [vmem:[#allocation3 + $0x278] sm:$0xff]
    %v279 = vld [vmem:[#allocation3 + $0x280] sm:$0xff]
    %v280 = vld [vmem:[#allocation3 + $0x288] sm:$0xff]
    %v281 = vld [vmem:[#allocation3 + $0x290] sm:$0xff]
    %v282 = vld [vmem:[#allocation3 + $0x298] sm:$0xff]
    %v283 = vld [vmem:[#allocation3 + $0x2a0] sm:$0xff]
    %v284 = vld [vmem:[#allocation3 + $0x2a8] sm:$0xff]
    %v285 = vld [vmem:[#allocation3 + $0x2b0] sm:$0xff]
    %v286 = vld [vmem:[#allocation3 + $0x2b8] sm:$0xff]
    %v287 = vld [vmem:[#allocation3 + $0x2c0] sm:$0xff]
    %v288 = vld [vmem:[#allocation3 + $0x2c8] sm:$0xff]
    %v289 = vld [vmem:[#allocation3 + $0x2d0] sm:$0xff]
    %v290 = vld [vmem:[#allocation3 + $0x2d8] sm:$0xff]
    %v291 = vld [vmem:[#allocation3 + $0x2e0] sm:$0xff]
    %v292 = vld [vmem:[#allocation3 + $0x2e8] sm:$0xff]
    %v293 = vld [vmem:[#allocation3 + $0x2f0] sm:$0xff]
    %v294 = vld [vmem:[#allocation3 + $0x2f8] sm:$0xff]
    %v295 = vld [vmem:[#allocation3 + $0x300] sm:$0xff]
    %v296 = vld [vmem:[#allocation3 + $0x308] sm:$0xff]
    %v297 = vld [vmem:[#allocation3 + $0x310] sm:$0xff]
    %v298 = vld [vmem:[#allocation3 + $0x318] sm:$0xff]
    %v299 = vld [vmem:[#allocation3 + $0x320] sm:$0xff]
    %v300 = vld [vmem:[#allocation3 + $0x328] sm:$0xff]
    %v301 = vld [vmem:[#allocation3 + $0x330] sm:$0xff]
    %v302 = vld [vmem:[#allocation3 + $0x338] sm:$0xff]
    %v303 = vld [vmem:[#allocation3 + $0x340] sm:$0xff]
    %v304 = vld [vmem:[#allocation3 + $0x348] sm:$0xff]
    %v305 = vld [vmem:[#allocation3 + $0x350] sm:$0xff]
    %v306 = vld [vmem:[#allocation3 + $0x358] sm:$0xff]
    %v307 = vld [vmem:[#allocation3 + $0x360] sm:$0xff]
    %v308 = vld [vmem:[#allocation3 + $0x368] sm:$0xff]
    %v309 = vld [vmem:[#allocation3 + $0x370] sm:$0xff]
    %v310 = vld [vmem:[#allocation3 + $0x378] sm:$0xff]
    %v311 = vld [vmem:[#allocation3 + $0x380] sm:$0xff]
    %v312 = vld [vmem:[#allocation3 + $0x388] sm:$0xff]
    %v313 = vld [vmem:[#allocation3 + $0x390] sm:$0xff]
    %v314 = vld [vmem:[#allocation3 + $0x398] sm:$0xff]
    %v315 = vld [vmem:[#allocation3 + $0x3a0] sm:$0xff]
    %v316 = vld [vmem:[#allocation3 + $0x3a8] sm:$0xff]
    %v317 = vld [vmem:[#allocation3 + $0x3b0] sm:$0xff]
    %v318 = vld [vmem:[#allocation3 + $0x3b8] sm:$0xff]
    %v319 = vld [vmem:[#allocation3 + $0x3c0] sm:$0xff]
    %v320 = vld [vmem:[#allocation3 + $0x3c8] sm:$0xff]
    %v321 = vld [vmem:[#allocation3 + $0x3d0] sm:$0xff]
    %v322 = vld [vmem:[#allocation3 + $0x3d8] sm:$0xff]
    %v323 = vld [vmem:[#allocation3 + $0x3e0] sm:$0xff]
    %v324 = vld [vmem:[#allocation3 + $0x3e8] sm:$0xff]
    %v325 = vld [vmem:[#allocation3 + $0x3f0] sm:$0xff]
    %v326 = vld [vmem:[#allocation3 + $0x3f8] sm:$0xff]
    %v327 = vld [vmem:[#allocation3 + $0x400] sm:$0xff]
    %v328 = vld [vmem:[#allocation3 + $0x408] sm:$0xff]
    %v329 = vld [vmem:[#allocation3 + $0x410] sm:$0xff]
    %v330 = vld [vmem:[#allocation3 + $0x418] sm:$0xff]
    %v331 = vld [vmem:[#allocation3 + $0x420] sm:$0xff]
    %v332 = vld [vmem:[#allocation3 + $0x428] sm:$0xff]
    %v333 = vld [vmem:[#allocation3 + $0x430] sm:$0xff]
    %v334 = vld [vmem:[#allocation3 + $0x438] sm:$0xff]
    %v335 = vld [vmem:[#allocation3 + $0x440] sm:$0xff]
    %v336 = vld [vmem:[#allocation3 + $0x448] sm:$0xff]
    %v337 = vld [vmem:[#allocation3 + $0x450] sm:$0xff]
    %v338 = vld [vmem:[#allocation3 + $0x458] sm:$0xff]
    %v339 = vld [vmem:[#allocation3 + $0x460] sm:$0xff]
    %v340 = vld [vmem:[#allocation3 + $0x468] sm:$0xff]
    %v341 = vld [vmem:[#allocation3 + $0x470] sm:$0xff]
    %v342 = vld [vmem:[#allocation3 + $0x478] sm:$0xff]
    %v343 = vld [vmem:[#allocation3 + $0x480] sm:$0xff]
    %v344 = vld [vmem:[#allocation3 + $0x488] sm:$0xff]
    %v345 = vld [vmem:[#allocation3 + $0x490] sm:$0xff]
    %v346 = vld [vmem:[#allocation3 + $0x498] sm:$0xff]
    %v347 = vld [vmem:[#allocation3 + $0x4a0] sm:$0xff]
    %v348 = vld [vmem:[#allocation3 + $0x4a8] sm:$0xff]
    %v349 = vld [vmem:[#allocation3 + $0x4b0] sm:$0xff]
    %v350 = vld [vmem:[#allocation3 + $0x4b8] sm:$0xff]
    %v351 = vld [vmem:[#allocation3 + $0x4c0] sm:$0xff]
    %v352 = vld [vmem:[#allocation3 + $0x4c8] sm:$0xff]
    %v353 = vld [vmem:[#allocation3 + $0x4d0] sm:$0xff]
    %v354 = vld [vmem:[#allocation3 + $0x4d8] sm:$0xff]
    %v355 = vld [vmem:[#allocation3 + $0x4e0] sm:$0xff]
    %v356 = vld [vmem:[#allocation3 + $0x4e8] sm:$0xff]
    %v357 = vld [vmem:[#allocation3 + $0x4f0] sm:$0xff]
    %v358 = vld [vmem:[#allocation3 + $0x4f8] sm:$0xff]
    %v359 = vld [vmem:[#allocation3 + $0x500] sm:$0xff]
    %v360 = vld [vmem:[#allocation3 + $0x508] sm:$0xff]
    %v361 = vld [vmem:[#allocation3 + $0x510] sm:$0xff]
    %v362 = vld [vmem:[#allocation3 + $0x518] sm:$0xff]
    %v363 = vld [vmem:[#allocation3 + $0x520] sm:$0xff]
    %v364 = vld [vmem:[#allocation3 + $0x528] sm:$0xff]
    %v365 = vld [vmem:[#allocation3 + $0x530] sm:$0xff]
    %v366 = vld [vmem:[#allocation3 + $0x538] sm:$0xff]
    %v367 = vld [vmem:[#allocation3 + $0x540] sm:$0xff]
    %v368 = vld [vmem:[#allocation3 + $0x548] sm:$0xff]
    %v369 = vld [vmem:[#allocation3 + $0x550] sm:$0xff]
    %v370 = vld [vmem:[#allocation3 + $0x558] sm:$0xff]
    %v371 = vld [vmem:[#allocation3 + $0x560] sm:$0xff]
    %v372 = vld [vmem:[#allocation3 + $0x568] sm:$0xff]
    %v373 = vld [vmem:[#allocation3 + $0x570] sm:$0xff]
    %v374 = vld [vmem:[#allocation3 + $0x578] sm:$0xff]
    %v375 = vld [vmem:[#allocation3 + $0x580] sm:$0xff]
    %v376 = vld [vmem:[#allocation3 + $0x588] sm:$0xff]
    %v377 = vld [vmem:[#allocation3 + $0x590] sm:$0xff]
    %v378 = vld [vmem:[#allocation3 + $0x598] sm:$0xff]
    %v379 = vld [vmem:[#allocation3 + $0x5a0] sm:$0xff]
    %v380 = vld [vmem:[#allocation3 + $0x5a8] sm:$0xff]
    %v381 = vld [vmem:[#allocation3 + $0x5b0] sm:$0xff]
    %v382 = vld [vmem:[#allocation3 + $0x5b8] sm:$0xff]
    %v383 = vld [vmem:[#allocation3 + $0x5c0] sm:$0xff]
    %v384 = vld [vmem:[#allocation3 + $0x5c8] sm:$0xff]
    %v385 = vld [vmem:[#allocation3 + $0x5d0] sm:$0xff]
    %v386 = vld [vmem:[#allocation3 + $0x5d8] sm:$0xff]
    %v387 = vld [vmem:[#allocation3 + $0x5e0] sm:$0xff]
    %v388 = vld [vmem:[#allocation3 + $0x5e8] sm:$0xff]
    %v389 = vld [vmem:[#allocation3 + $0x5f0] sm:$0xff]
    %v390 = vld [vmem:[#allocation3 + $0x5f8] sm:$0xff]
    %v391 = vld [vmem:[#allocation3 + $0x600] sm:$0xff]
    %v392 = vld [vmem:[#allocation3 + $0x608] sm:$0xff]
    %v393 = vld [vmem:[#allocation3 + $0x610] sm:$0xff]
    %v394 = vld [vmem:[#allocation3 + $0x618] sm:$0xff]
    %v395 = vld [vmem:[#allocation3 + $0x620] sm:$0xff]
    %v396 = vld [vmem:[#allocation3 + $0x628] sm:$0xff]
    %v397 = vld [vmem:[#allocation3 + $0x630] sm:$0xff]
    %v398 = vld [vmem:[#allocation3 + $0x638] sm:$0xff]
    %v399 = vld [vmem:[#allocation3 + $0x640] sm:$0xff]
    %v400 = vld [vmem:[#allocation3 + $0x648] sm:$0xff]
    %v401 = vld [vmem:[#allocation3 + $0x650] sm:$0xff]
    %v402 = vld [vmem:[#allocation3 + $0x658] sm:$0xff]
    %v403 = vld [vmem:[#allocation3 + $0x660] sm:$0xff]
    %v404 = vld [vmem:[#allocation3 + $0x668] sm:$0xff]
    %v405 = vld [vmem:[#allocation3 + $0x670] sm:$0xff]
    %v406 = vld [vmem:[#allocation3 + $0x678] sm:$0xff]
    %v407 = vld [vmem:[#allocation3 + $0x680] sm:$0xff]
    %v408 = vld [vmem:[#allocation3 + $0x688] sm:$0xff]
    %v409 = vld [vmem:[#allocation3 + $0x690] sm:$0xff]
    %v410 = vld [vmem:[#allocation3 + $0x698] sm:$0xff]
    %v411 = vld [vmem:[#allocation3 + $0x6a0] sm:$0xff]
    %v412 = vld [vmem:[#allocation3 + $0x6a8] sm:$0xff]
    %v413 = vld [vmem:[#allocation3 + $0x6b0] sm:$0xff]
    %v414 = vld [vmem:[#allocation3 + $0x6b8] sm:$0xff]
    %v415 = vld [vmem:[#allocation3 + $0x6c0] sm:$0xff]
    %v416 = vld [vmem:[#allocation3 + $0x6c8] sm:$0xff]
    %v417 = vld [vmem:[#allocation3 + $0x6d0] sm:$0xff]
    %v418 = vld [vmem:[#allocation3 + $0x6d8] sm:$0xff]
    %v419 = vld [vmem:[#allocation3 + $0x6e0] sm:$0xff]
    %v420 = vld [vmem:[#allocation3 + $0x6e8] sm:$0xff]
    %v421 = vld [vmem:[#allocation3 + $0x6f0] sm:$0xff]
    %v422 = vld [vmem:[#allocation3 + $0x6f8] sm:$0xff]
    %v423 = vld [vmem:[#allocation3 + $0x700] sm:$0xff]
    %v424 = vld [vmem:[#allocation3 + $0x708] sm:$0xff]
    %v425 = vld [vmem:[#allocation3 + $0x710] sm:$0xff]
    %v426 = vld [vmem:[#allocation3 + $0x718] sm:$0xff]
    %v427 = vld [vmem:[#allocation3 + $0x720] sm:$0xff]
    %v428 = vld [vmem:[#allocation3 + $0x728] sm:$0xff]
    %v429 = vld [vmem:[#allocation3 + $0x730] sm:$0xff]
    %v430 = vld [vmem:[#allocation3 + $0x738] sm:$0xff]
    %v431 = vld [vmem:[#allocation3 + $0x740] sm:$0xff]
    %v432 = vld [vmem:[#allocation3 + $0x748] sm:$0xff]
    %v433 = vld [vmem:[#allocation3 + $0x750] sm:$0xff]
    %v434 = vld [vmem:[#allocation3 + $0x758] sm:$0xff]
    %v435 = vld [vmem:[#allocation3 + $0x760] sm:$0xff]
    %v436 = vld [vmem:[#allocation3 + $0x768] sm:$0xff]
    %v437 = vld [vmem:[#allocation3 + $0x770] sm:$0xff]
    %v438 = vld [vmem:[#allocation3 + $0x778] sm:$0xff]
    %v439 = vld [vmem:[#allocation3 + $0x780] sm:$0xff]
    %v440 = vld [vmem:[#allocation3 + $0x788] sm:$0xff]
    %v441 = vld [vmem:[#allocation3 + $0x790] sm:$0xff]
    %v442 = vld [vmem:[#allocation3 + $0x798] sm:$0xff]
    %v443 = vld [vmem:[#allocation3 + $0x7a0] sm:$0xff]
    %v444 = vld [vmem:[#allocation3 + $0x7a8] sm:$0xff]
    %v445 = vld [vmem:[#allocation3 + $0x7b0] sm:$0xff]
    %v446 = vld [vmem:[#allocation3 + $0x7b8] sm:$0xff]
    %v447 = vld [vmem:[#allocation3 + $0x7c0] sm:$0xff]
    %v448 = vld [vmem:[#allocation3 + $0x7c8] sm:$0xff]
    %v449 = vld [vmem:[#allocation3 + $0x7d0] sm:$0xff]
    %v450 = vld [vmem:[#allocation3 + $0x7d8] sm:$0xff]
    %v451 = vld [vmem:[#allocation3 + $0x7e0] sm:$0xff]
    %v452 = vld [vmem:[#allocation3 + $0x7e8] sm:$0xff]
    %v453 = vld [vmem:[#allocation3 + $0x7f0] sm:$0xff]
    %v454 = vld [vmem:[#allocation3 + $0x7f8] sm:$0xff]
    %v455 = vld [vmem:[#allocation3 + $0x800] sm:$0xff]
    %v456 = vld [vmem:[#allocation3 + $0x808] sm:$0xff]
    %v457 = vld [vmem:[#allocation3 + $0x810] sm:$0xff]
    %v458 = vld [vmem:[#allocation3 + $0x818] sm:$0xff]
    %v459 = vld [vmem:[#allocation3 + $0x820] sm:$0xff]
    %v460 = vld [vmem:[#allocation3 + $0x828] sm:$0xff]
    %v461 = vld [vmem:[#allocation3 + $0x830] sm:$0xff]
    %v462 = vld [vmem:[#allocation3 + $0x838] sm:$0xff]
    %v463 = vld [vmem:[#allocation3 + $0x840] sm:$0xff]
    %v464 = vld [vmem:[#allocation3 + $0x848] sm:$0xff]
    %v465 = vld [vmem:[#allocation3 + $0x850] sm:$0xff]
    %v466 = vld [vmem:[#allocation3 + $0x858] sm:$0xff]
    %v467 = vld [vmem:[#allocation3 + $0x860] sm:$0xff]
    %v468 = vld [vmem:[#allocation3 + $0x868] sm:$0xff]
    %v469 = vld [vmem:[#allocation3 + $0x870] sm:$0xff]
    %v470 = vld [vmem:[#allocation3 + $0x878] sm:$0xff]
    %v471 = vld [vmem:[#allocation3 + $0x880] sm:$0xff]
    %v472 = vld [vmem:[#allocation3 + $0x888] sm:$0xff]
    %v473 = vld [vmem:[#allocation3 + $0x890] sm:$0xff]
    %v474 = vld [vmem:[#allocation3 + $0x898] sm:$0xff]
    %v475 = vld [vmem:[#allocation3 + $0x8a0] sm:$0xff]
    %v476 = vld [vmem:[#allocation3 + $0x8a8] sm:$0xff]
    %v477 = vld [vmem:[#allocation3 + $0x8b0] sm:$0xff]
    %v478 = vld [vmem:[#allocation3 + $0x8b8] sm:$0xff]
    %v479 = vld [vmem:[#allocation3 + $0x8c0] sm:$0xff]
    %v480 = vld [vmem:[#allocation3 + $0x8c8] sm:$0xff]
    %v481 = vld [vmem:[#allocation3 + $0x8d0] sm:$0xff]
    %v482 = vld [vmem:[#allocation3 + $0x8d8] sm:$0xff]
    %v483 = vld [vmem:[#allocation3 + $0x8e0] sm:$0xff]
    %v484 = vld [vmem:[#allocation3 + $0x8e8] sm:$0xff]
    %v485 = vld [vmem:[#allocation3 + $0x8f0] sm:$0xff]
    %v486 = vld [vmem:[#allocation3 + $0x8f8] sm:$0xff]
    %v487 = vld [vmem:[#allocation3 + $0x900] sm:$0xff]
    %v488 = vld [vmem:[#allocation3 + $0x908] sm:$0xff]
    %v489 = vld [vmem:[#allocation3 + $0x910] sm:$0xff]
    %v490 = vld [vmem:[#allocation3 + $0x918] sm:$0xff]
    %v491 = vld [vmem:[#allocation3 + $0x920] sm:$0xff]
    %v492 = vld [vmem:[#allocation3 + $0x928] sm:$0xff]
    %v493 = vld [vmem:[#allocation3 + $0x930] sm:$0xff]
    %v494 = vld [vmem:[#allocation3 + $0x938] sm:$0xff]
    %v495 = vld [vmem:[#allocation3 + $0x940] sm:$0xff]
    %v496 = vld [vmem:[#allocation3 + $0x948] sm:$0xff]
    %v497 = vld [vmem:[#allocation3 + $0x950] sm:$0xff]
    %v498 = vld [vmem:[#allocation3 + $0x958] sm:$0xff]
    %v499 = vld [vmem:[#allocation3 + $0x960] sm:$0xff]
    %v500 = vld [vmem:[#allocation3 + $0x968] sm:$0xff]
    %v501 = vld [vmem:[#allocation3 + $0x970] sm:$0xff]
    %v502 = vld [vmem:[#allocation3 + $0x978] sm:$0xff]
    %v503 = vld [vmem:[#allocation3 + $0x980] sm:$0xff]
    %v504 = vld [vmem:[#allocation3 + $0x988] sm:$0xff]
    %v505 = vld [vmem:[#allocation3 + $0x990] sm:$0xff]
    %v506 = vld [vmem:[#allocation3 + $0x998] sm:$0xff]
    %v507 = vld [vmem:[#allocation3 + $0x9a0] sm:$0xff]
    %v508 = vld [vmem:[#allocation3 + $0x9a8] sm:$0xff]
    %v509 = vld [vmem:[#allocation3 + $0x9b0] sm:$0xff]
    %v510 = vld [vmem:[#allocation3 + $0x9b8] sm:$0xff]
    %v511 = vld [vmem:[#allocation3 + $0x9c0] sm:$0xff]
    %v512 = vld [vmem:[#allocation3 + $0x9c8] sm:$0xff]
    %v513 = vld [vmem:[#allocation3 + $0x9d0] sm:$0xff]
    %v514 = vld [vmem:[#allocation3 + $0x9d8] sm:$0xff]
    %v515 = vld [vmem:[#allocation3 + $0x9e0] sm:$0xff]
    %v516 = vld [vmem:[#allocation3 + $0x9e8] sm:$0xff]
    %v517 = vld [vmem:[#allocation3 + $0x9f0] sm:$0xff]
    %v518 = vld [vmem:[#allocation3 + $0x9f8] sm:$0xff]
    %v519 = vld [vmem:[#allocation3 + $0xa00] sm:$0xff]
    %v520 = vld [vmem:[#allocation3 + $0xa08] sm:$0xff]
    %v521 = vld [vmem:[#allocation3 + $0xa10] sm:$0xff]
    %v522 = vld [vmem:[#allocation3 + $0xa18] sm:$0xff]
    %v523 = vld [vmem:[#allocation3 + $0xa20] sm:$0xff]
    %v524 = vld [vmem:[#allocation3 + $0xa28] sm:$0xff]
    %v525 = vld [vmem:[#allocation3 + $0xa30] sm:$0xff]
    %v526 = vld [vmem:[#allocation3 + $0xa38] sm:$0xff]
    %v527 = vld [vmem:[#allocation3 + $0xa40] sm:$0xff]
    %v528 = vld [vmem:[#allocation3 + $0xa48] sm:$0xff]
    %v529 = vld [vmem:[#allocation3 + $0xa50] sm:$0xff]
    %v530 = vld [vmem:[#allocation3 + $0xa58] sm:$0xff]
    %v531 = vld [vmem:[#allocation3 + $0xa60] sm:$0xff]
    %v532 = vld [vmem:[#allocation3 + $0xa68] sm:$0xff]
    %v533 = vld [vmem:[#allocation3 + $0xa70] sm:$0xff]
    %v534 = vld [vmem:[#allocation3 + $0xa78] sm:$0xff]
    %v535 = vld [vmem:[#allocation3 + $0xa80] sm:$0xff]
    %v536 = vld [vmem:[#allocation3 + $0xa88] sm:$0xff]
    %v537 = vld [vmem:[#allocation3 + $0xa90] sm:$0xff]
    %v538 = vld [vmem:[#allocation3 + $0xa98] sm:$0xff]
    %v539 = vld [vmem:[#allocation3 + $0xaa0] sm:$0xff]
    %v540 = vld [vmem:[#allocation3 + $0xaa8] sm:$0xff]
    %v541 = vld [vmem:[#allocation3 + $0xab0] sm:$0xff]
    %v542 = vld [vmem:[#allocation3 + $0xab8] sm:$0xff]
    %v543 = vld [vmem:[#allocation3 + $0xac0] sm:$0xff]
    %v544 = vld [vmem:[#allocation3 + $0xac8] sm:$0xff]
    %v545 = vld [vmem:[#allocation3 + $0xad0] sm:$0xff]
    %v546 = vld [vmem:[#allocation3 + $0xad8] sm:$0xff]
    %v547 = vld [vmem:[#allocation3 + $0xae0] sm:$0xff]
    %v548 = vld [vmem:[#allocation3 + $0xae8] sm:$0xff]
    %v549 = vld [vmem:[#allocation3 + $0xaf0] sm:$0xff]
    %v550 = vld [vmem:[#allocation3 + $0xaf8] sm:$0xff]
    %v551 = vld [vmem:[#allocation3 + $0xb00] sm:$0xff]
    %v552 = vld [vmem:[#allocation3 + $0xb08] sm:$0xff]
    %v553 = vld [vmem:[#allocation3 + $0xb10] sm:$0xff]
    %v554 = vld [vmem:[#allocation3 + $0xb18] sm:$0xff]
    %v555 = vld [vmem:[#allocation3 + $0xb20] sm:$0xff]
    %v556 = vld [vmem:[#allocation3 + $0xb28] sm:$0xff]
    %v557 = vld [vmem:[#allocation3 + $0xb30] sm:$0xff]
    %v558 = vld [vmem:[#allocation3 + $0xb38] sm:$0xff]
    %v559 = vld [vmem:[#allocation3 + $0xb40] sm:$0xff]
    %v560 = vld [vmem:[#allocation3 + $0xb48] sm:$0xff]
    %v561 = vld [vmem:[#allocation3 + $0xb50] sm:$0xff]
    %v562 = vld [vmem:[#allocation3 + $0xb58] sm:$0xff]
    %v563 = vld [vmem:[#allocation3 + $0xb60] sm:$0xff]
    %v564 = vld [vmem:[#allocation3 + $0xb68] sm:$0xff]
    %v565 = vld [vmem:[#allocation3 + $0xb70] sm:$0xff]
    %v566 = vld [vmem:[#allocation3 + $0xb78] sm:$0xff]
    %v567 = vld [vmem:[#allocation3 + $0xb80] sm:$0xff]
    %v568 = vld [vmem:[#allocation3 + $0xb88] sm:$0xff]
    %v569 = vld [vmem:[#allocation3 + $0xb90] sm:$0xff]
    %v570 = vld [vmem:[#allocation3 + $0xb98] sm:$0xff]
    %v571 = vld [vmem:[#allocation3 + $0xba0] sm:$0xff]
    %v572 = vld [vmem:[#allocation3 + $0xba8] sm:$0xff]
    %v573 = vld [vmem:[#allocation3 + $0xbb0] sm:$0xff]
    %v574 = vld [vmem:[#allocation3 + $0xbb8] sm:$0xff]
    %v575 = vld [vmem:[#allocation3 + $0xbc0] sm:$0xff]
    %v576 = vld [vmem:[#allocation3 + $0xbc8] sm:$0xff]
    %v577 = vld [vmem:[#allocation3 + $0xbd0] sm:$0xff]
    %v578 = vld [vmem:[#allocation3 + $0xbd8] sm:$0xff]
    %v579 = vld [vmem:[#allocation3 + $0xbe0] sm:$0xff]
    %v580 = vld [vmem:[#allocation3 + $0xbe8] sm:$0xff]
    %v581 = vld [vmem:[#allocation3 + $0xbf0] sm:$0xff]
    %v582 = vld [vmem:[#allocation3 + $0xbf8] sm:$0xff]
    %v583 = vld [vmem:[#allocation3 + $0xc00] sm:$0xff]
    %v584 = vld [vmem:[#allocation3 + $0xc08] sm:$0xff]
    %v585 = vld [vmem:[#allocation3 + $0xc10] sm:$0xff]
    %v586 = vld [vmem:[#allocation3 + $0xc18] sm:$0xff]
    %v587 = vld [vmem:[#allocation3 + $0xc20] sm:$0xff]
    %v588 = vld [vmem:[#allocation3 + $0xc28] sm:$0xff]
    %v589 = vld [vmem:[#allocation3 + $0xc30] sm:$0xff]
    %v590 = vld [vmem:[#allocation3 + $0xc38] sm:$0xff]
    %v591 = vld [vmem:[#allocation3 + $0xc40] sm:$0xff]
    %v592 = vld [vmem:[#allocation3 + $0xc48] sm:$0xff]
    %v593 = vld [vmem:[#allocation3 + $0xc50] sm:$0xff]
    %v594 = vld [vmem:[#allocation3 + $0xc58] sm:$0xff]
    %v595 = vld [vmem:[#allocation3 + $0xc60] sm:$0xff]
    %v596 = vld [vmem:[#allocation3 + $0xc68] sm:$0xff]
    %v597 = vld [vmem:[#allocation3 + $0xc70] sm:$0xff]
    %v598 = vld [vmem:[#allocation3 + $0xc78] sm:$0xff]
    %v599 = vld [vmem:[#allocation3 + $0xc80] sm:$0xff]
    %v600 = vld [vmem:[#allocation3 + $0xc88] sm:$0xff]
    %v601 = vld [vmem:[#allocation3 + $0xc90] sm:$0xff]
    %v602 = vld [vmem:[#allocation3 + $0xc98] sm:$0xff]
    %v603 = vld [vmem:[#allocation3 + $0xca0] sm:$0xff]
    %v604 = vld [vmem:[#allocation3 + $0xca8] sm:$0xff]
    %v605 = vld [vmem:[#allocation3 + $0xcb0] sm:$0xff]
    %v606 = vld [vmem:[#allocation3 + $0xcb8] sm:$0xff]
    %v607 = vld [vmem:[#allocation3 + $0xcc0] sm:$0xff]
    %v608 = vld [vmem:[#allocation3 + $0xcc8] sm:$0xff]
    %v609 = vld [vmem:[#allocation3 + $0xcd0] sm:$0xff]
    %v610 = vld [vmem:[#allocation3 + $0xcd8] sm:$0xff]
    %v611 = vld [vmem:[#allocation3 + $0xce0] sm:$0xff]
    %v612 = vld [vmem:[#allocation3 + $0xce8] sm:$0xff]
    %v613 = vld [vmem:[#allocation3 + $0xcf0] sm:$0xff]
    %v614 = vld [vmem:[#allocation3 + $0xcf8] sm:$0xff]
    %v615 = vld [vmem:[#allocation3 + $0xd00] sm:$0xff]
    %v616 = vld [vmem:[#allocation3 + $0xd08] sm:$0xff]
    %v617 = vld [vmem:[#allocation3 + $0xd10] sm:$0xff]
    %v618 = vld [vmem:[#allocation3 + $0xd18] sm:$0xff]
    %v619 = vld [vmem:[#allocation3 + $0xd20] sm:$0xff]
    %v620 = vld [vmem:[#allocation3 + $0xd28] sm:$0xff]
    %v621 = vld [vmem:[#allocation3 + $0xd30] sm:$0xff]
    %v622 = vld [vmem:[#allocation3 + $0xd38] sm:$0xff]
    %v623 = vld [vmem:[#allocation3 + $0xd40] sm:$0xff]
    %v624 = vld [vmem:[#allocation3 + $0xd48] sm:$0xff]
    %v625 = vld [vmem:[#allocation3 + $0xd50] sm:$0xff]
    %v626 = vld [vmem:[#allocation3 + $0xd58] sm:$0xff]
    %v627 = vld [vmem:[#allocation3 + $0xd60] sm:$0xff]
    %v628 = vld [vmem:[#allocation3 + $0xd68] sm:$0xff]
    %v629 = vld [vmem:[#allocation3 + $0xd70] sm:$0xff]
    %v630 = vld [vmem:[#allocation3 + $0xd78] sm:$0xff]
    %v631 = vld [vmem:[#allocation3 + $0xd80] sm:$0xff]
    %v632 = vld [vmem:[#allocation3 + $0xd88] sm:$0xff]
    %v633 = vld [vmem:[#allocation3 + $0xd90] sm:$0xff]
    %v634 = vld [vmem:[#allocation3 + $0xd98] sm:$0xff]
    %v635 = vld [vmem:[#allocation3 + $0xda0] sm:$0xff]
    %v636 = vld [vmem:[#allocation3 + $0xda8] sm:$0xff]
    %v637 = vld [vmem:[#allocation3 + $0xdb0] sm:$0xff]
    %v638 = vld [vmem:[#allocation3 + $0xdb8] sm:$0xff]
    %v639 = vld [vmem:[#allocation3 + $0xdc0] sm:$0xff]
    %v640 = vld [vmem:[#allocation3 + $0xdc8] sm:$0xff]
    %v641 = vld [vmem:[#allocation3 + $0xdd0] sm:$0xff]
    %v642 = vld [vmem:[#allocation3 + $0xdd8] sm:$0xff]
    %v643 = vld [vmem:[#allocation3 + $0xde0] sm:$0xff]
    %v644 = vld [vmem:[#allocation3 + $0xde8] sm:$0xff]
    %v645 = vld [vmem:[#allocation3 + $0xdf0] sm:$0xff]
    %v646 = vld [vmem:[#allocation3 + $0xdf8] sm:$0xff]
    %v647 = vld [vmem:[#allocation3 + $0xe00] sm:$0xff]
    %v648 = vld [vmem:[#allocation3 + $0xe08] sm:$0xff]
    %v649 = vld [vmem:[#allocation3 + $0xe10] sm:$0xff]
    %v650 = vld [vmem:[#allocation3 + $0xe18] sm:$0xff]
    %v651 = vld [vmem:[#allocation3 + $0xe20] sm:$0xff]
    %v652 = vld [vmem:[#allocation3 + $0xe28] sm:$0xff]
    %v653 = vld [vmem:[#allocation3 + $0xe30] sm:$0xff]
    %v654 = vld [vmem:[#allocation3 + $0xe38] sm:$0xff]
    %v655 = vld [vmem:[#allocation3 + $0xe40] sm:$0xff]
    %v656 = vld [vmem:[#allocation3 + $0xe48] sm:$0xff]
    %v657 = vld [vmem:[#allocation3 + $0xe50] sm:$0xff]
    %v658 = vld [vmem:[#allocation3 + $0xe58] sm:$0xff]
    %v659 = vld [vmem:[#allocation3 + $0xe60] sm:$0xff]
    %v660 = vld [vmem:[#allocation3 + $0xe68] sm:$0xff]
    %v661 = vld [vmem:[#allocation3 + $0xe70] sm:$0xff]
    %v662 = vld [vmem:[#allocation3 + $0xe78] sm:$0xff]
    %v663 = vld [vmem:[#allocation3 + $0xe80] sm:$0xff]
    %v664 = vld [vmem:[#allocation3 + $0xe88] sm:$0xff]
    %v665 = vld [vmem:[#allocation3 + $0xe90] sm:$0xff]
    %v666 = vld [vmem:[#allocation3 + $0xe98] sm:$0xff]
    %v667 = vld [vmem:[#allocation3 + $0xea0] sm:$0xff]
    %v668 = vld [vmem:[#allocation3 + $0xea8] sm:$0xff]
    %v669 = vld [vmem:[#allocation3 + $0xeb0] sm:$0xff]
    %v670 = vld [vmem:[#allocation3 + $0xeb8] sm:$0xff]
    %v671 = vld [vmem:[#allocation3 + $0xec0] sm:$0xff]
    %v672 = vld [vmem:[#allocation3 + $0xec8] sm:$0xff]
    %v673 = vld [vmem:[#allocation3 + $0xed0] sm:$0xff]
    %v674 = vld [vmem:[#allocation3 + $0xed8] sm:$0xff]
    %v675 = vld [vmem:[#allocation3 + $0xee0] sm:$0xff]
    %v676 = vld [vmem:[#allocation3 + $0xee8] sm:$0xff]
    %v677 = vld [vmem:[#allocation3 + $0xef0] sm:$0xff]
    %v678 = vld [vmem:[#allocation3 + $0xef8] sm:$0xff]
    %v679 = vld [vmem:[#allocation3 + $0xf00] sm:$0xff]
    %v680 = vld [vmem:[#allocation3 + $0xf08] sm:$0xff]
    %v681 = vld [vmem:[#allocation3 + $0xf10] sm:$0xff]
    %v682 = vld [vmem:[#allocation3 + $0xf18] sm:$0xff]
    %v683 = vld [vmem:[#allocation3 + $0xf20] sm:$0xff]
    %v684 = vld [vmem:[#allocation3 + $0xf28] sm:$0xff]
    %v685 = vld [vmem:[#allocation3 + $0xf30] sm:$0xff]
    %v686 = vld [vmem:[#allocation3 + $0xf38] sm:$0xff]
    %v687 = vld [vmem:[#allocation3 + $0xf40] sm:$0xff]
    %v688 = vld [vmem:[#allocation3 + $0xf48] sm:$0xff]
    %v689 = vld [vmem:[#allocation3 + $0xf50] sm:$0xff]
    %v690 = vld [vmem:[#allocation3 + $0xf58] sm:$0xff]
    %v691 = vld [vmem:[#allocation3 + $0xf60] sm:$0xff]
    %v692 = vld [vmem:[#allocation3 + $0xf68] sm:$0xff]
    %v693 = vld [vmem:[#allocation3 + $0xf70] sm:$0xff]
    %v694 = vld [vmem:[#allocation3 + $0xf78] sm:$0xff]
    %v695 = vld [vmem:[#allocation3 + $0xf80] sm:$0xff]
    %v696 = vld [vmem:[#allocation3 + $0xf88] sm:$0xff]
    %v697 = vld [vmem:[#allocation3 + $0xf90] sm:$0xff]
    %v698 = vld [vmem:[#allocation3 + $0xf98] sm:$0xff]
    %v699 = vld [vmem:[#allocation3 + $0xfa0] sm:$0xff]
    %v700 = vld [vmem:[#allocation3 + $0xfa8] sm:$0xff]
    %v701 = vld [vmem:[#allocation3 + $0xfb0] sm:$0xff]
    %v702 = vld [vmem:[#allocation3 + $0xfb8] sm:$0xff]
    %v703 = vld [vmem:[#allocation3 + $0xfc0] sm:$0xff]
    %v704 = vld [vmem:[#allocation3 + $0xfc8] sm:$0xff]
    %v705 = vld [vmem:[#allocation3 + $0xfd0] sm:$0xff]
    %v706 = vld [vmem:[#allocation3 + $0xfd8] sm:$0xff]
    %v707 = vld [vmem:[#allocation3 + $0xfe0] sm:$0xff]
    %v708 = vld [vmem:[#allocation3 + $0xfe8] sm:$0xff]
    %v709 = vld [vmem:[#allocation3 + $0xff0] sm:$0xff]
    %v710 = vld [vmem:[#allocation3 + $0xff8] sm:$0xff]
    %v711 = vld [vmem:[#allocation3 + $0x1000] sm:$0xff]
    %v712 = vld [vmem:[#allocation3 + $0x1008] sm:$0xff]
    %v713 = vld [vmem:[#allocation3 + $0x1010] sm:$0xff]
    %v714 = vld [vmem:[#allocation3 + $0x1018] sm:$0xff]
    %v715 = vld [vmem:[#allocation3 + $0x1020] sm:$0xff]
    %v716 = vld [vmem:[#allocation3 + $0x1028] sm:$0xff]
    %v717 = vld [vmem:[#allocation3 + $0x1030] sm:$0xff]
    %v718 = vld [vmem:[#allocation3 + $0x1038] sm:$0xff]
    %v719 = vld [vmem:[#allocation3 + $0x1040] sm:$0xff]
    %v720 = vld [vmem:[#allocation3 + $0x1048] sm:$0xff]
    %v721 = vld [vmem:[#allocation3 + $0x1050] sm:$0xff]
    %v722 = vld [vmem:[#allocation3 + $0x1058] sm:$0xff]
    %v723 = vld [vmem:[#allocation3 + $0x1060] sm:$0xff]
    %v724 = vld [vmem:[#allocation3 + $0x1068] sm:$0xff]
    %v725 = vld [vmem:[#allocation3 + $0x1070] sm:$0xff]
    %v726 = vld [vmem:[#allocation3 + $0x1078] sm:$0xff]
    %v727 = vld [vmem:[#allocation3 + $0x1080] sm:$0xff]
    %v728 = vld [vmem:[#allocation3 + $0x1088] sm:$0xff]
    %v729 = vld [vmem:[#allocation3 + $0x1090] sm:$0xff]
    %v730 = vld [vmem:[#allocation3 + $0x1098] sm:$0xff]
    %v731 = vld [vmem:[#allocation3 + $0x10a0] sm:$0xff]
    %v732 = vld [vmem:[#allocation3 + $0x10a8] sm:$0xff]
    %v733 = vld [vmem:[#allocation3 + $0x10b0] sm:$0xff]
    %v734 = vld [vmem:[#allocation3 + $0x10b8] sm:$0xff]
    %v735 = vld [vmem:[#allocation3 + $0x10c0] sm:$0xff]
    %v736 = vld [vmem:[#allocation3 + $0x10c8] sm:$0xff]
    %v737 = vld [vmem:[#allocation3 + $0x10d0] sm:$0xff]
    %v738 = vld [vmem:[#allocation3 + $0x10d8] sm:$0xff]
    %v739 = vld [vmem:[#allocation3 + $0x10e0] sm:$0xff]
    %v740 = vld [vmem:[#allocation3 + $0x10e8] sm:$0xff]
    %v741 = vld [vmem:[#allocation3 + $0x10f0] sm:$0xff]
    %v742 = vld [vmem:[#allocation3 + $0x10f8] sm:$0xff]
    %v743 = vld [vmem:[#allocation3 + $0x1100] sm:$0xff]
    %v744 = vld [vmem:[#allocation3 + $0x1108] sm:$0xff]
    %v745 = vld [vmem:[#allocation3 + $0x1110] sm:$0xff]
    %v746 = vld [vmem:[#allocation3 + $0x1118] sm:$0xff]
    %v747 = vld [vmem:[#allocation3 + $0x1120] sm:$0xff]
    %v748 = vld [vmem:[#allocation3 + $0x1128] sm:$0xff]
    %v749 = vld [vmem:[#allocation3 + $0x1130] sm:$0xff]
    %v750 = vld [vmem:[#allocation3 + $0x1138] sm:$0xff]
    %v751 = vld [vmem:[#allocation3 + $0x1140] sm:$0xff]
    %v752 = vld [vmem:[#allocation3 + $0x1148] sm:$0xff]
    %v753 = vld [vmem:[#allocation3 + $0x1150] sm:$0xff]
    %v754 = vld [vmem:[#allocation3 + $0x1158] sm:$0xff]
    %v755 = vld [vmem:[#allocation3 + $0x1160] sm:$0xff]
    %v756 = vld [vmem:[#allocation3 + $0x1168] sm:$0xff]
    %v757 = vld [vmem:[#allocation3 + $0x1170] sm:$0xff]
    %v758 = vld [vmem:[#allocation3 + $0x1178] sm:$0xff]
    %v759 = vld [vmem:[#allocation3 + $0x1180] sm:$0xff]
    %v760 = vld [vmem:[#allocation3 + $0x1188] sm:$0xff]
    %v761 = vld [vmem:[#allocation3 + $0x1190] sm:$0xff]
    %v762 = vld [vmem:[#allocation3 + $0x1198] sm:$0xff]
    %v763 = vld [vmem:[#allocation3 + $0x11a0] sm:$0xff]
    %v764 = vld [vmem:[#allocation3 + $0x11a8] sm:$0xff]
    %v765 = vld [vmem:[#allocation3 + $0x11b0] sm:$0xff]
    %v766 = vld [vmem:[#allocation3 + $0x11b8] sm:$0xff]
    %v767 = vld [vmem:[#allocation3 + $0x11c0] sm:$0xff]
    %v768 = vld [vmem:[#allocation3 + $0x11c8] sm:$0xff]
    %v769 = vld [vmem:[#allocation3 + $0x11d0] sm:$0xff]
    %v770 = vld [vmem:[#allocation3 + $0x11d8] sm:$0xff]
    %v771 = vld [vmem:[#allocation3 + $0x11e0] sm:$0xff]
    %v772 = vld [vmem:[#allocation3 + $0x11e8] sm:$0xff]
    %v773 = vld [vmem:[#allocation3 + $0x11f0] sm:$0xff]
    %v774 = vld [vmem:[#allocation3 + $0x11f8] sm:$0xff]
    %775 = vmatprep.subr.mxu0 %v335
    %776 = vmatpush1.msra.mxu0 %v334
    %777 = vmatprep.subr.mxu0 %v326
    %778 = vmatpush1.msra.mxu0 %v325
    %779 = vmatprep.subr.mxu0 %v317
    %780 = vmatpush1.msra.mxu0 %v316
    %781 = vmatprep.subr.mxu0 %v308
    %782 = vmatpush1.msra.mxu0 %v307
    %783 = vmatprep.subr.mxu0 %v299
    %784 = vmatpush1.msra.mxu0 %v298
    %785 = vmatprep.subr.mxu0 %v290
    %786 = vmatpush1.msra.mxu0 %v289
    %787 = vmatprep.subr.mxu0 %v281
    %788 = vmatpush1.msra.mxu0 %v280
    %789 = vmatprep.subr.mxu0 %v272
    %790 = vmatpush1.msra.mxu0 %v271
    %791 = vmatprep.subr.mxu0 %v263
    %792 = vmatpush1.msra.mxu0 %v262
    %793 = vmatprep.subr.mxu0 %v254
    %794 = vmatpush1.msra.mxu0 %v253
    %795 = vmatprep.subr.mxu0 %v245
    %796 = vmatpush1.msra.mxu0 %v244
    %797 = vmatprep.subr.mxu0 %v236
    %798 = vmatpush1.msra.mxu0 %v235
    %799 = vmatprep.subr.mxu0 %v227
    %800 = vmatpush1.msra.mxu0 %v226
    %801 = vmatprep.subr.mxu0 %v218
    %802 = vmatpush1.msra.mxu0 %v217
    %803 = vmatprep.subr.mxu0 %v209
    %804 = vmatpush1.msra.mxu0 %v208
    %805 = vmatprep.subr.mxu0 %v200
    %806 = vmatpush1.msra.mxu0 %v199
    %807 = vmatprep.subr.mxu0 %v479
    %808 = vmatpush2.msra.mxu0 %v478
    %809 = vmatprep.subr.mxu0 %v470
    %810 = vmatpush2.msra.mxu0 %v469
    %811 = vmatprep.subr.mxu0 %v461
    %812 = vmatpush2.msra.mxu0 %v460
    %813 = vmatprep.subr.mxu0 %v452
    %814 = vmatpush2.msra.mxu0 %v451
    %815 = vmatprep.subr.mxu0 %v443
    %816 = vmatpush2.msra.mxu0 %v442
    %817 = vmatprep.subr.mxu0 %v434
    %818 = vmatpush2.msra.mxu0 %v433
    %819 = vmatprep.subr.mxu0 %v425
    %820 = vmatpush2.msra.mxu0 %v424
    %821 = vmatprep.subr.mxu0 %v416
    %822 = vmatpush2.msra.mxu0 %v415
    %823 = vmatprep.subr.mxu0 %v407
    %824 = vmatpush2.msra.mxu0 %v406
    %825 = vmatprep.subr.mxu0 %v398
    %826 = vmatpush2.msra.mxu0 %v397
    %827 = vmatprep.subr.mxu0 %v389
    %828 = vmatpush2.msra.mxu0 %v388
    %829 = vmatprep.subr.mxu0 %v380
    %830 = vmatpush2.msra.mxu0 %v379
    %831 = vmatprep.subr.mxu0 %v371
    %832 = vmatpush2.msra.mxu0 %v370
    %833 = vmatprep.subr.mxu0 %v362
    %834 = vmatpush2.msra.mxu0 %v361
    %835 = vmatprep.subr.mxu0 %v353
    %836 = vmatpush2.msra.mxu0 %v352
    %837 = vmatprep.subr.mxu0 %v344
    %838 = vmatpush2.msra.mxu0 %v343
    %839 = vmatprep.mubr.f32.mxu0 %v196
    %840 = vmatmul.mubr.f32.gmra.mxu0 %v195
    %v841 = vpop.f32.mrf.mxu0
    %v842 = vadd.f32 0.0, %v841
    %v843 = vpop.f32.mrf.mxu0
    %v844 = vadd.f32 0.0, %v843
    %845 = vdwg.mxu0
    %846 = vmatprep.subr.mxu0 %v623
    %847 = vmatpush1.msra.mxu0 %v622
    %848 = vmatprep.subr.mxu0 %v614
    %849 = vmatpush1.msra.mxu0 %v613
    %850 = vmatprep.subr.mxu0 %v605
    %851 = vmatpush1.msra.mxu0 %v604
    %852 = vmatprep.subr.mxu0 %v596
    %853 = vmatpush1.msra.mxu0 %v595
    %854 = vmatprep.subr.mxu0 %v587
    %855 = vmatpush1.msra.mxu0 %v586
    %856 = vmatprep.subr.mxu0 %v578
    %857 = vmatpush1.msra.mxu0 %v577
    %858 = vmatprep.subr.mxu0 %v569
    %859 = vmatpush1.msra.mxu0 %v568
    %860 = vmatprep.subr.mxu0 %v560
    %861 = vmatpush1.msra.mxu0 %v559
    %862 = vmatprep.subr.mxu0 %v551
    %863 = vmatpush1.msra.mxu0 %v550
    %864 = vmatprep.subr.mxu0 %v542
    %865 = vmatpush1.msra.mxu0 %v541
    %866 = vmatprep.subr.mxu0 %v533
    %867 = vmatpush1.msra.mxu0 %v532
    %868 = vmatprep.subr.mxu0 %v524
    %869 = vmatpush1.msra.mxu0 %v523
    %870 = vmatprep.subr.mxu0 %v515
    %871 = vmatpush1.msra.mxu0 %v514
    %872 = vmatprep.subr.mxu0 %v506
    %873 = vmatpush1.msra.mxu0 %v505
    %874 = vmatprep.subr.mxu0 %v497
    %875 = vmatpush1.msra.mxu0 %v496
    %876 = vmatprep.subr.mxu0 %v488
    %877 = vmatpush1.msra.mxu0 %v487
    %878 = vmatprep.subr.mxu0 %v767
    %879 = vmatpush2.msra.mxu0 %v766
    %880 = vmatprep.subr.mxu0 %v758
    %881 = vmatpush2.msra.mxu0 %v757
    %882 = vmatprep.subr.mxu0 %v749
    %883 = vmatpush2.msra.mxu0 %v748
    %884 = vmatprep.subr.mxu0 %v740
    %885 = vmatpush2.msra.mxu0 %v739
    %886 = vmatprep.subr.mxu0 %v731
    %887 = vmatpush2.msra.mxu0 %v730
    %888 = vmatprep.subr.mxu0 %v722
    %889 = vmatpush2.msra.mxu0 %v721
    %890 = vmatprep.subr.mxu0 %v713
    %891 = vmatpush2.msra.mxu0 %v712
    %892 = vmatprep.subr.mxu0 %v704
    %893 = vmatpush2.msra.mxu0 %v703
    %894 = vmatprep.subr.mxu0 %v695
    %895 = vmatpush2.msra.mxu0 %v694
    %896 = vmatprep.subr.mxu0 %v686
    %897 = vmatpush2.msra.mxu0 %v685
    %898 = vmatprep.subr.mxu0 %v677
    %899 = vmatpush2.msra.mxu0 %v676
    %900 = vmatprep.subr.mxu0 %v668
    %901 = vmatpush2.msra.mxu0 %v667
    %902 = vmatprep.subr.mxu0 %v659
    %903 = vmatpush2.msra.mxu0 %v658
    %904 = vmatprep.subr.mxu0 %v650
    %905 = vmatpush2.msra.mxu0 %v649
    %906 = vmatprep.subr.mxu0 %v641
    %907 = vmatpush2.msra.mxu0 %v640
    %908 = vmatprep.subr.mxu0 %v632
    %909 = vmatpush2.msra.mxu0 %v631
    %910 = vmatprep.mubr.f32.mxu0 %v198
    %911 = vmatmul.mubr.f32.gmra.mxu0 %v197
    %v912 = vpop.f32.mrf.mxu0
    %v913 = vadd.f32 %v842, %v912
    %v914 = vpop.f32.mrf.mxu0
    %v915 = vadd.f32 %v844, %v914
    %916 = vdwg.mxu0
    %917 = vmatprep.subr.mxu0 %v337
    %918 = vmatpush1.msra.mxu0 %v336
    %919 = vmatprep.subr.mxu0 %v328
    %920 = vmatpush1.msra.mxu0 %v327
    %921 = vmatprep.subr.mxu0 %v319
    %922 = vmatpush1.msra.mxu0 %v318
    %923 = vmatprep.subr.mxu0 %v310
    %924 = vmatpush1.msra.mxu0 %v309
    %925 = vmatprep.subr.mxu0 %v301
    %926 = vmatpush1.msra.mxu0 %v300
    %927 = vmatprep.subr.mxu0 %v292
    %928 = vmatpush1.msra.mxu0 %v291
    %929 = vmatprep.subr.mxu0 %v283
    %930 = vmatpush1.msra.mxu0 %v282
    %931 = vmatprep.subr.mxu0 %v274
    %932 = vmatpush1.msra.mxu0 %v273
    %933 = vmatprep.subr.mxu0 %v265
    %934 = vmatpush1.msra.mxu0 %v264
    %935 = vmatprep.subr.mxu0 %v256
    %936 = vmatpush1.msra.mxu0 %v255
    %937 = vmatprep.subr.mxu0 %v247
    %938 = vmatpush1.msra.mxu0 %v246
    %939 = vmatprep.subr.mxu0 %v238
    %940 = vmatpush1.msra.mxu0 %v237
    %941 = vmatprep.subr.mxu0 %v229
    %942 = vmatpush1.msra.mxu0 %v228
    %943 = vmatprep.subr.mxu0 %v220
    %944 = vmatpush1.msra.mxu0 %v219
    %945 = vmatprep.subr.mxu0 %v211
    %946 = vmatpush1.msra.mxu0 %v210
    %947 = vmatprep.subr.mxu0 %v202
    %948 = vmatpush1.msra.mxu0 %v201
    %949 = vmatprep.subr.mxu0 %v481
    %950 = vmatpush2.msra.mxu0 %v480
    %951 = vmatprep.subr.mxu0 %v472
    %952 = vmatpush2.msra.mxu0 %v471
    %953 = vmatprep.subr.mxu0 %v463
    %954 = vmatpush2.msra.mxu0 %v462
    %955 = vmatprep.subr.mxu0 %v454
    %956 = vmatpush2.msra.mxu0 %v453
    %957 = vmatprep.subr.mxu0 %v445
    %958 = vmatpush2.msra.mxu0 %v444
    %959 = vmatprep.subr.mxu0 %v436
    %960 = vmatpush2.msra.mxu0 %v435
    %961 = vmatprep.subr.mxu0 %v427
    %962 = vmatpush2.msra.mxu0 %v426
    %963 = vmatprep.subr.mxu0 %v418
    %964 = vmatpush2.msra.mxu0 %v417
    %965 = vmatprep.subr.mxu0 %v409
    %966 = vmatpush2.msra.mxu0 %v408
    %967 = vmatprep.subr.mxu0 %v400
    %968 = vmatpush2.msra.mxu0 %v399
    %969 = vmatprep.subr.mxu0 %v391
    %970 = vmatpush2.msra.mxu0 %v390
    %971 = vmatprep.subr.mxu0 %v382
    %972 = vmatpush2.msra.mxu0 %v381
    %973 = vmatprep.subr.mxu0 %v373
    %974 = vmatpush2.msra.mxu0 %v372
    %975 = vmatprep.subr.mxu0 %v364
    %976 = vmatpush2.msra.mxu0 %v363
    %977 = vmatprep.subr.mxu0 %v355
    %978 = vmatpush2.msra.mxu0 %v354
    %979 = vmatprep.subr.mxu0 %v346
    %980 = vmatpush2.msra.mxu0 %v345
    %981 = vmatprep.mubr.f32.mxu0 %v196
    %982 = vmatmul.mubr.f32.gmra.mxu0 %v195
    %v983 = vpop.f32.mrf.mxu0
    %v984 = vadd.f32 0.0, %v983
    %v985 = vpop.f32.mrf.mxu0
    %v986 = vadd.f32 0.0, %v985
    %987 = vdwg.mxu0
    %988 = vmatprep.subr.mxu0 %v625
    %989 = vmatpush1.msra.mxu0 %v624
    %990 = vmatprep.subr.mxu0 %v616
    %991 = vmatpush1.msra.mxu0 %v615
    %992 = vmatprep.subr.mxu0 %v607
    %993 = vmatpush1.msra.mxu0 %v606
    %994 = vmatprep.subr.mxu0 %v598
    %995 = vmatpush1.msra.mxu0 %v597
    %996 = vmatprep.subr.mxu0 %v589
    %997 = vmatpush1.msra.mxu0 %v588
    %998 = vmatprep.subr.mxu0 %v580
    %999 = vmatpush1.msra.mxu0 %v579
    %1000 = vmatprep.subr.mxu0 %v571
    %1001 = vmatpush1.msra.mxu0 %v570
    %1002 = vmatprep.subr.mxu0 %v562
    %1003 = vmatpush1.msra.mxu0 %v561
    %1004 = vmatprep.subr.mxu0 %v553
    %1005 = vmatpush1.msra.mxu0 %v552
    %1006 = vmatprep.subr.mxu0 %v544
    %1007 = vmatpush1.msra.mxu0 %v543
    %1008 = vmatprep.subr.mxu0 %v535
    %1009 = vmatpush1.msra.mxu0 %v534
    %1010 = vmatprep.subr.mxu0 %v526
    %1011 = vmatpush1.msra.mxu0 %v525
    %1012 = vmatprep.subr.mxu0 %v517
    %1013 = vmatpush1.msra.mxu0 %v516
    %1014 = vmatprep.subr.mxu0 %v508
    %1015 = vmatpush1.msra.mxu0 %v507
    %1016 = vmatprep.subr.mxu0 %v499
    %1017 = vmatpush1.msra.mxu0 %v498
    %1018 = vmatprep.subr.mxu0 %v490
    %1019 = vmatpush1.msra.mxu0 %v489
    %1020 = vmatprep.subr.mxu0 %v769
    %1021 = vmatpush2.msra.mxu0 %v768
    %1022 = vmatprep.subr.mxu0 %v760
    %1023 = vmatpush2.msra.mxu0 %v759
    %1024 = vmatprep.subr.mxu0 %v751
    %1025 = vmatpush2.msra.mxu0 %v750
    %1026 = vmatprep.subr.mxu0 %v742
    %1027 = vmatpush2.msra.mxu0 %v741
    %1028 = vmatprep.subr.mxu0 %v733
    %1029 = vmatpush2.msra.mxu0 %v732
    %1030 = vmatprep.subr.mxu0 %v724
    %1031 = vmatpush2.msra.mxu0 %v723
    %1032 = vmatprep.subr.mxu0 %v715
    %1033 = vmatpush2.msra.mxu0 %v714
    %1034 = vmatprep.subr.mxu0 %v706
    %1035 = vmatpush2.msra.mxu0 %v705
    %1036 = vmatprep.subr.mxu0 %v697
    %1037 = vmatpush2.msra.mxu0 %v696
    %1038 = vmatprep.subr.mxu0 %v688
    %1039 = vmatpush2.msra.mxu0 %v687
    %1040 = vmatprep.subr.mxu0 %v679
    %1041 = vmatpush2.msra.mxu0 %v678
    %1042 = vmatprep.subr.mxu0 %v670
    %1043 = vmatpush2.msra.mxu0 %v669
    %1044 = vmatprep.subr.mxu0 %v661
    %1045 = vmatpush2.msra.mxu0 %v660
    %1046 = vmatprep.subr.mxu0 %v652
    %1047 = vmatpush2.msra.mxu0 %v651
    %1048 = vmatprep.subr.mxu0 %v643
    %1049 = vmatpush2.msra.mxu0 %v642
    %1050 = vmatprep.subr.mxu0 %v634
    %1051 = vmatpush2.msra.mxu0 %v633
    %1052 = vmatprep.mubr.f32.mxu0 %v198
    %1053 = vmatmul.mubr.f32.gmra.mxu0 %v197
    %v1054 = vpop.f32.mrf.mxu0
    %v1055 = vadd.f32 %v984, %v1054
    %v1056 = vpop.f32.mrf.mxu0
    %v1057 = vadd.f32 %v986, %v1056
    %1058 = vdwg.mxu0
    %1059 = vmatprep.subr.mxu0 %v339
    %1060 = vmatpush1.msra.mxu0 %v338
    %1061 = vmatprep.subr.mxu0 %v330
    %1062 = vmatpush1.msra.mxu0 %v329
    %1063 = vmatprep.subr.mxu0 %v321
    %1064 = vmatpush1.msra.mxu0 %v320
    %1065 = vmatprep.subr.mxu0 %v312
    %1066 = vmatpush1.msra.mxu0 %v311
    %1067 = vmatprep.subr.mxu0 %v303
    %1068 = vmatpush1.msra.mxu0 %v302
    %1069 = vmatprep.subr.mxu0 %v294
    %1070 = vmatpush1.msra.mxu0 %v293
    %1071 = vmatprep.subr.mxu0 %v285
    %1072 = vmatpush1.msra.mxu0 %v284
    %1073 = vmatprep.subr.mxu0 %v276
    %1074 = vmatpush1.msra.mxu0 %v275
    %1075 = vmatprep.subr.mxu0 %v267
    %1076 = vmatpush1.msra.mxu0 %v266
    %1077 = vmatprep.subr.mxu0 %v258
    %1078 = vmatpush1.msra.mxu0 %v257
    %1079 = vmatprep.subr.mxu0 %v249
    %1080 = vmatpush1.msra.mxu0 %v248
    %1081 = vmatprep.subr.mxu0 %v240
    %1082 = vmatpush1.msra.mxu0 %v239
    %1083 = vmatprep.subr.mxu0 %v231
    %1084 = vmatpush1.msra.mxu0 %v230
    %1085 = vmatprep.subr.mxu0 %v222
    %1086 = vmatpush1.msra.mxu0 %v221
    %1087 = vmatprep.subr.mxu0 %v213
    %1088 = vmatpush1.msra.mxu0 %v212
    %1089 = vmatprep.subr.mxu0 %v204
    %1090 = vmatpush1.msra.mxu0 %v203
    %1091 = vmatprep.subr.mxu0 %v483
    %1092 = vmatpush2.msra.mxu0 %v482
    %1093 = vmatprep.subr.mxu0 %v474
    %1094 = vmatpush2.msra.mxu0 %v473
    %1095 = vmatprep.subr.mxu0 %v465
    %1096 = vmatpush2.msra.mxu0 %v464
    %1097 = vmatprep.subr.mxu0 %v456
    %1098 = vmatpush2.msra.mxu0 %v455
    %1099 = vmatprep.subr.mxu0 %v447
    %1100 = vmatpush2.msra.mxu0 %v446
    %1101 = vmatprep.subr.mxu0 %v438
    %1102 = vmatpush2.msra.mxu0 %v437
    %1103 = vmatprep.subr.mxu0 %v429
    %1104 = vmatpush2.msra.mxu0 %v428
    %1105 = vmatprep.subr.mxu0 %v420
    %1106 = vmatpush2.msra.mxu0 %v419
    %1107 = vmatprep.subr.mxu0 %v411
    %1108 = vmatpush2.msra.mxu0 %v410
    %1109 = vmatprep.subr.mxu0 %v402
    %1110 = vmatpush2.msra.mxu0 %v401
    %1111 = vmatprep.subr.mxu0 %v393
    %1112 = vmatpush2.msra.mxu0 %v392
    %1113 = vmatprep.subr.mxu0 %v384
    %1114 = vmatpush2.msra.mxu0 %v383
    %1115 = vmatprep.subr.mxu0 %v375
    %1116 = vmatpush2.msra.mxu0 %v374
    %1117 = vmatprep.subr.mxu0 %v366
    %1118 = vmatpush2.msra.mxu0 %v365
    %1119 = vmatprep.subr.mxu0 %v357
    %1120 = vmatpush2.msra.mxu0 %v356
    %1121 = vmatprep.subr.mxu0 %v348
    %1122 = vmatpush2.msra.mxu0 %v347
    %1123 = vmatprep.mubr.f32.mxu0 %v196
    %1124 = vmatmul.mubr.f32.gmra.mxu0 %v195
    %v1125 = vpop.f32.mrf.mxu0
    %v1126 = vadd.f32 0.0, %v1125
    %v1127 = vpop.f32.mrf.mxu0
    %v1128 = vadd.f32 0.0, %v1127
    %1129 = vdwg.mxu0
    %1130 = vmatprep.subr.mxu0 %v627
    %1131 = vmatpush1.msra.mxu0 %v626
    %1132 = vmatprep.subr.mxu0 %v618
    %1133 = vmatpush1.msra.mxu0 %v617
    %1134 = vmatprep.subr.mxu0 %v609
    %1135 = vmatpush1.msra.mxu0 %v608
    %1136 = vmatprep.subr.mxu0 %v600
    %1137 = vmatpush1.msra.mxu0 %v599
    %1138 = vmatprep.subr.mxu0 %v591
    %1139 = vmatpush1.msra.mxu0 %v590
    %1140 = vmatprep.subr.mxu0 %v582
    %1141 = vmatpush1.msra.mxu0 %v581
    %1142 = vmatprep.subr.mxu0 %v573
    %1143 = vmatpush1.msra.mxu0 %v572
    %1144 = vmatprep.subr.mxu0 %v564
    %1145 = vmatpush1.msra.mxu0 %v563
    %1146 = vmatprep.subr.mxu0 %v555
    %1147 = vmatpush1.msra.mxu0 %v554
    %1148 = vmatprep.subr.mxu0 %v546
    %1149 = vmatpush1.msra.mxu0 %v545
    %1150 = vmatprep.subr.mxu0 %v537
    %1151 = vmatpush1.msra.mxu0 %v536
    %1152 = vmatprep.subr.mxu0 %v528
    %1153 = vmatpush1.msra.mxu0 %v527
    %1154 = vmatprep.subr.mxu0 %v519
    %1155 = vmatpush1.msra.mxu0 %v518
    %1156 = vmatprep.subr.mxu0 %v510
    %1157 = vmatpush1.msra.mxu0 %v509
    %1158 = vmatprep.subr.mxu0 %v501
    %1159 = vmatpush1.msra.mxu0 %v500
    %1160 = vmatprep.subr.mxu0 %v492
    %1161 = vmatpush1.msra.mxu0 %v491
    %1162 = vmatprep.subr.mxu0 %v771
    %1163 = vmatpush2.msra.mxu0 %v770
    %1164 = vmatprep.subr.mxu0 %v762
    %1165 = vmatpush2.msra.mxu0 %v761
    %1166 = vmatprep.subr.mxu0 %v753
    %1167 = vmatpush2.msra.mxu0 %v752
    %1168 = vmatprep.subr.mxu0 %v744
    %1169 = vmatpush2.msra.mxu0 %v743
    %1170 = vmatprep.subr.mxu0 %v735
    %1171 = vmatpush2.msra.mxu0 %v734
    %1172 = vmatprep.subr.mxu0 %v726
    %1173 = vmatpush2.msra.mxu0 %v725
    %1174 = vmatprep.subr.mxu0 %v717
    %1175 = vmatpush2.msra.mxu0 %v716
    %1176 = vmatprep.subr.mxu0 %v708
    %1177 = vmatpush2.msra.mxu0 %v707
    %1178 = vmatprep.subr.mxu0 %v699
    %1179 = vmatpush2.msra.mxu0 %v698
    %1180 = vmatprep.subr.mxu0 %v690
    %1181 = vmatpush2.msra.mxu0 %v689
    %1182 = vmatprep.subr.mxu0 %v681
    %1183 = vmatpush2.msra.mxu0 %v680
    %1184 = vmatprep.subr.mxu0 %v672
    %1185 = vmatpush2.msra.mxu0 %v671
    %1186 = vmatprep.subr.mxu0 %v663
    %1187 = vmatpush2.msra.mxu0 %v662
    %1188 = vmatprep.subr.mxu0 %v654
    %1189 = vmatpush2.msra.mxu0 %v653
    %1190 = vmatprep.subr.mxu0 %v645
    %1191 = vmatpush2.msra.mxu0 %v644
    %1192 = vmatprep.subr.mxu0 %v636
    %1193 = vmatpush2.msra.mxu0 %v635
    %1194 = vmatprep.mubr.f32.mxu0 %v198
    %1195 = vmatmul.mubr.f32.gmra.mxu0 %v197
    %v1196 = vpop.f32.mrf.mxu0
    %v1197 = vadd.f32 %v1126, %v1196
    %v1198 = vpop.f32.mrf.mxu0
    %v1199 = vadd.f32 %v1128, %v1198
    %1200 = vdwg.mxu0
    %1201 = vmatprep.subr.mxu0 %v341
    %1202 = vmatpush1.msra.mxu0 %v340
    %1203 = vmatprep.subr.mxu0 %v332
    %1204 = vmatpush1.msra.mxu0 %v331
    %1205 = vmatprep.subr.mxu0 %v323
    %1206 = vmatpush1.msra.mxu0 %v322
    %1207 = vmatprep.subr.mxu0 %v314
    %1208 = vmatpush1.msra.mxu0 %v313
    %1209 = vmatprep.subr.mxu0 %v305
    %1210 = vmatpush1.msra.mxu0 %v304
    %1211 = vmatprep.subr.mxu0 %v296
    %1212 = vmatpush1.msra.mxu0 %v295
    %1213 = vmatprep.subr.mxu0 %v287
    %1214 = vmatpush1.msra.mxu0 %v286
    %1215 = vmatprep.subr.mxu0 %v278
    %1216 = vmatpush1.msra.mxu0 %v277
    %1217 = vmatprep.subr.mxu0 %v269
    %1218 = vmatpush1.msra.mxu0 %v268
    %1219 = vmatprep.subr.mxu0 %v260
    %1220 = vmatpush1.msra.mxu0 %v259
    %1221 = vmatprep.subr.mxu0 %v251
    %1222 = vmatpush1.msra.mxu0 %v250
    %1223 = vmatprep.subr.mxu0 %v242
    %1224 = vmatpush1.msra.mxu0 %v241
    %1225 = vmatprep.subr.mxu0 %v233
    %1226 = vmatpush1.msra.mxu0 %v232
    %1227 = vmatprep.subr.mxu0 %v224
    %1228 = vmatpush1.msra.mxu0 %v223
    %1229 = vmatprep.subr.mxu0 %v215
    %1230 = vmatpush1.msra.mxu0 %v214
    %1231 = vmatprep.subr.mxu0 %v206
    %1232 = vmatpush1.msra.mxu0 %v205
    %1233 = vmatprep.subr.mxu0 %v485
    %1234 = vmatpush2.msra.mxu0 %v484
    %1235 = vmatprep.subr.mxu0 %v476
    %1236 = vmatpush2.msra.mxu0 %v475
    %1237 = vmatprep.subr.mxu0 %v467
    %1238 = vmatpush2.msra.mxu0 %v466
    %1239 = vmatprep.subr.mxu0 %v458
    %1240 = vmatpush2.msra.mxu0 %v457
    %1241 = vmatprep.subr.mxu0 %v449
    %1242 = vmatpush2.msra.mxu0 %v448
    %1243 = vmatprep.subr.mxu0 %v440
    %1244 = vmatpush2.msra.mxu0 %v439
    %1245 = vmatprep.subr.mxu0 %v431
    %1246 = vmatpush2.msra.mxu0 %v430
    %1247 = vmatprep.subr.mxu0 %v422
    %1248 = vmatpush2.msra.mxu0 %v421
    %1249 = vmatprep.subr.mxu0 %v413
    %1250 = vmatpush2.msra.mxu0 %v412
    %1251 = vmatprep.subr.mxu0 %v404
    %1252 = vmatpush2.msra.mxu0 %v403
    %1253 = vmatprep.subr.mxu0 %v395
    %1254 = vmatpush2.msra.mxu0 %v394
    %1255 = vmatprep.subr.mxu0 %v386
    %1256 = vmatpush2.msra.mxu0 %v385
    %1257 = vmatprep.subr.mxu0 %v377
    %1258 = vmatpush2.msra.mxu0 %v376
    %1259 = vmatprep.subr.mxu0 %v368
    %1260 = vmatpush2.msra.mxu0 %v367
    %1261 = vmatprep.subr.mxu0 %v359
    %1262 = vmatpush2.msra.mxu0 %v358
    %1263 = vmatprep.subr.mxu0 %v350
    %1264 = vmatpush2.msra.mxu0 %v349
    %1265 = vmatprep.mubr.f32.mxu0 %v196
    %1266 = vmatmul.mubr.f32.gmra.mxu0 %v195
    %v1267 = vpop.f32.mrf.mxu0
    %v1268 = vadd.f32 0.0, %v1267
    %v1269 = vpop.f32.mrf.mxu0
    %v1270 = vadd.f32 0.0, %v1269
    %1271 = vdwg.mxu0
    %1272 = vmatprep.subr.mxu0 %v629
    %1273 = vmatpush1.msra.mxu0 %v628
    %1274 = vmatprep.subr.mxu0 %v620
    %1275 = vmatpush1.msra.mxu0 %v619
    %1276 = vmatprep.subr.mxu0 %v611
    %1277 = vmatpush1.msra.mxu0 %v610
    %1278 = vmatprep.subr.mxu0 %v602
    %1279 = vmatpush1.msra.mxu0 %v601
    %1280 = vmatprep.subr.mxu0 %v593
    %1281 = vmatpush1.msra.mxu0 %v592
    %1282 = vmatprep.subr.mxu0 %v584
    %1283 = vmatpush1.msra.mxu0 %v583
    %1284 = vmatprep.subr.mxu0 %v575
    %1285 = vmatpush1.msra.mxu0 %v574
    %1286 = vmatprep.subr.mxu0 %v566
    %1287 = vmatpush1.msra.mxu0 %v565
    %1288 = vmatprep.subr.mxu0 %v557
    %1289 = vmatpush1.msra.mxu0 %v556
    %1290 = vmatprep.subr.mxu0 %v548
    %1291 = vmatpush1.msra.mxu0 %v547
    %1292 = vmatprep.subr.mxu0 %v539
    %1293 = vmatpush1.msra.mxu0 %v538
    %1294 = vmatprep.subr.mxu0 %v530
    %1295 = vmatpush1.msra.mxu0 %v529
    %1296 = vmatprep.subr.mxu0 %v521
    %1297 = vmatpush1.msra.mxu0 %v520
    %1298 = vmatprep.subr.mxu0 %v512
    %1299 = vmatpush1.msra.mxu0 %v511
    %1300 = vmatprep.subr.mxu0 %v503
    %1301 = vmatpush1.msra.mxu0 %v502
    %1302 = vmatprep.subr.mxu0 %v494
    %1303 = vmatpush1.msra.mxu0 %v493
    %1304 = vmatprep.subr.mxu0 %v773
    %1305 = vmatpush2.msra.mxu0 %v772
    %1306 = vmatprep.subr.mxu0 %v764
    %1307 = vmatpush2.msra.mxu0 %v763
    %1308 = vmatprep.subr.mxu0 %v755
    %1309 = vmatpush2.msra.mxu0 %v754
    %1310 = vmatprep.subr.mxu0 %v746
    %1311 = vmatpush2.msra.mxu0 %v745
    %1312 = vmatprep.subr.mxu0 %v737
    %1313 = vmatpush2.msra.mxu0 %v736
    %1314 = vmatprep.subr.mxu0 %v728
    %1315 = vmatpush2.msra.mxu0 %v727
    %1316 = vmatprep.subr.mxu0 %v719
    %1317 = vmatpush2.msra.mxu0 %v718
    %1318 = vmatprep.subr.mxu0 %v710
    %1319 = vmatpush2.msra.mxu0 %v709
    %1320 = vmatprep.subr.mxu0 %v701
    %1321 = vmatpush2.msra.mxu0 %v700
    %1322 = vmatprep.subr.mxu0 %v692
    %1323 = vmatpush2.msra.mxu0 %v691
    %1324 = vmatprep.subr.mxu0 %v683
    %1325 = vmatpush2.msra.mxu0 %v682
    %1326 = vmatprep.subr.mxu0 %v674
    %1327 = vmatpush2.msra.mxu0 %v673
    %1328 = vmatprep.subr.mxu0 %v665
    %1329 = vmatpush2.msra.mxu0 %v664
    %1330 = vmatprep.subr.mxu0 %v656
    %1331 = vmatpush2.msra.mxu0 %v655
    %1332 = vmatprep.subr.mxu0 %v647
    %1333 = vmatpush2.msra.mxu0 %v646
    %1334 = vmatprep.subr.mxu0 %v638
    %1335 = vmatpush2.msra.mxu0 %v637
    %1336 = vmatprep.mubr.f32.mxu0 %v198
    %1337 = vmatmul.mubr.f32.gmra.mxu0 %v197
    %v1338 = vpop.f32.mrf.mxu0
    %v1339 = vadd.f32 %v1268, %v1338
    %v1340 = vpop.f32.mrf.mxu0
    %v1341 = vadd.f32 %v1270, %v1340
    %1342 = vdwg.mxu0
    %1343 = vmatprep.subr.mxu0 0.0
    %1344 = vmatpush1.msra.mxu0 %v342
    %1345 = vmatprep.subr.mxu0 0.0
    %1346 = vmatpush1.msra.mxu0 %v333
    %1347 = vmatprep.subr.mxu0 0.0
    %1348 = vmatpush1.msra.mxu0 %v324
    %1349 = vmatprep.subr.mxu0 0.0
    %1350 = vmatpush1.msra.mxu0 %v315
    %1351 = vmatprep.subr.mxu0 0.0
    %1352 = vmatpush1.msra.mxu0 %v306
    %1353 = vmatprep.subr.mxu0 0.0
    %1354 = vmatpush1.msra.mxu0 %v297
    %1355 = vmatprep.subr.mxu0 0.0
    %1356 = vmatpush1.msra.mxu0 %v288
    %1357 = vmatprep.subr.mxu0 0.0
    %1358 = vmatpush1.msra.mxu0 %v279
    %1359 = vmatprep.subr.mxu0 0.0
    %1360 = vmatpush1.msra.mxu0 %v270
    %1361 = vmatprep.subr.mxu0 0.0
    %1362 = vmatpush1.msra.mxu0 %v261
    %1363 = vmatprep.subr.mxu0 0.0
    %1364 = vmatpush1.msra.mxu0 %v252
    %1365 = vmatprep.subr.mxu0 0.0
    %1366 = vmatpush1.msra.mxu0 %v243
    %1367 = vmatprep.subr.mxu0 0.0
    %1368 = vmatpush1.msra.mxu0 %v234
    %1369 = vmatprep.subr.mxu0 0.0
    %1370 = vmatpush1.msra.mxu0 %v225
    %1371 = vmatprep.subr.mxu0 0.0
    %1372 = vmatpush1.msra.mxu0 %v216
    %1373 = vmatprep.subr.mxu0 0.0
    %1374 = vmatpush1.msra.mxu0 %v207
    %1375 = vmatprep.subr.mxu0 0.0
    %1376 = vmatpush2.msra.mxu0 %v486
    %1377 = vmatprep.subr.mxu0 0.0
    %1378 = vmatpush2.msra.mxu0 %v477
    %1379 = vmatprep.subr.mxu0 0.0
    %1380 = vmatpush2.msra.mxu0 %v468
    %1381 = vmatprep.subr.mxu0 0.0
    %1382 = vmatpush2.msra.mxu0 %v459
    %1383 = vmatprep.subr.mxu0 0.0
    %1384 = vmatpush2.msra.mxu0 %v450
    %1385 = vmatprep.subr.mxu0 0.0
    %1386 = vmatpush2.msra.mxu0 %v441
    %1387 = vmatprep.subr.mxu0 0.0
    %1388 = vmatpush2.msra.mxu0 %v432
    %1389 = vmatprep.subr.mxu0 0.0
    %1390 = vmatpush2.msra.mxu0 %v423
    %1391 = vmatprep.subr.mxu0 0.0
    %1392 = vmatpush2.msra.mxu0 %v414
    %1393 = vmatprep.subr.mxu0 0.0
    %1394 = vmatpush2.msra.mxu0 %v405
    %1395 = vmatprep.subr.mxu0 0.0
    %1396 = vmatpush2.msra.mxu0 %v396
    %1397 = vmatprep.subr.mxu0 0.0
    %1398 = vmatpush2.msra.mxu0 %v387
    %1399 = vmatprep.subr.mxu0 0.0
    %1400 = vmatpush2.msra.mxu0 %v378
    %1401 = vmatprep.subr.mxu0 0.0
    %1402 = vmatpush2.msra.mxu0 %v369
    %1403 = vmatprep.subr.mxu0 0.0
    %1404 = vmatpush2.msra.mxu0 %v360
    %1405 = vmatprep.subr.mxu0 0.0
    %1406 = vmatpush2.msra.mxu0 %v351
    %1407 = vmatprep.mubr.f32.mxu0 %v196
    %1408 = vmatmul.mubr.f32.gmra.mxu0 %v195
    %v1409 = vpop.f32.mrf.mxu0
    %v1410 = vadd.f32 0.0, %v1409
    %v1411 = vpop.f32.mrf.mxu0
    %1412 = vdwg.mxu0
    %1413 = vmatprep.subr.mxu0 0.0
    %1414 = vmatpush1.msra.mxu0 %v630
    %1415 = vmatprep.subr.mxu0 0.0
    %1416 = vmatpush1.msra.mxu0 %v621
    %1417 = vmatprep.subr.mxu0 0.0
    %1418 = vmatpush1.msra.mxu0 %v612
    %1419 = vmatprep.subr.mxu0 0.0
    %1420 = vmatpush1.msra.mxu0 %v603
    %1421 = vmatprep.subr.mxu0 0.0
    %1422 = vmatpush1.msra.mxu0 %v594
    %1423 = vmatprep.subr.mxu0 0.0
    %1424 = vmatpush1.msra.mxu0 %v585
    %1425 = vmatprep.subr.mxu0 0.0
    %1426 = vmatpush1.msra.mxu0 %v576
    %1427 = vmatprep.subr.mxu0 0.0
    %1428 = vmatpush1.msra.mxu0 %v567
    %1429 = vmatprep.subr.mxu0 0.0
    %1430 = vmatpush1.msra.mxu0 %v558
    %1431 = vmatprep.subr.mxu0 0.0
    %1432 = vmatpush1.msra.mxu0 %v549
    %1433 = vmatprep.subr.mxu0 0.0
    %1434 = vmatpush1.msra.mxu0 %v540
    %1435 = vmatprep.subr.mxu0 0.0
    %1436 = vmatpush1.msra.mxu0 %v531
    %1437 = vmatprep.subr.mxu0 0.0
    %1438 = vmatpush1.msra.mxu0 %v522
    %1439 = vmatprep.subr.mxu0 0.0
    %1440 = vmatpush1.msra.mxu0 %v513
    %1441 = vmatprep.subr.mxu0 0.0
    %1442 = vmatpush1.msra.mxu0 %v504
    %1443 = vmatprep.subr.mxu0 0.0
    %1444 = vmatpush1.msra.mxu0 %v495
    %1445 = vmatprep.subr.mxu0 0.0
    %1446 = vmatpush2.msra.mxu0 %v774
    %1447 = vmatprep.subr.mxu0 0.0
    %1448 = vmatpush2.msra.mxu0 %v765
    %1449 = vmatprep.subr.mxu0 0.0
    %1450 = vmatpush2.msra.mxu0 %v756
    %1451 = vmatprep.subr.mxu0 0.0
    %1452 = vmatpush2.msra.mxu0 %v747
    %1453 = vmatprep.subr.mxu0 0.0
    %1454 = vmatpush2.msra.mxu0 %v738
    %1455 = vmatprep.subr.mxu0 0.0
    %1456 = vmatpush2.msra.mxu0 %v729
    %1457 = vmatprep.subr.mxu0 0.0
    %1458 = vmatpush2.msra.mxu0 %v720
    %1459 = vmatprep.subr.mxu0 0.0
    %1460 = vmatpush2.msra.mxu0 %v711
    %1461 = vmatprep.subr.mxu0 0.0
    %1462 = vmatpush2.msra.mxu0 %v702
    %1463 = vmatprep.subr.mxu0 0.0
    %1464 = vmatpush2.msra.mxu0 %v693
    %1465 = vmatprep.subr.mxu0 0.0
    %1466 = vmatpush2.msra.mxu0 %v684
    %1467 = vmatprep.subr.mxu0 0.0
    %1468 = vmatpush2.msra.mxu0 %v675
    %1469 = vmatprep.subr.mxu0 0.0
    %1470 = vmatpush2.msra.mxu0 %v666
    %1471 = vmatprep.subr.mxu0 0.0
    %1472 = vmatpush2.msra.mxu0 %v657
    %1473 = vmatprep.subr.mxu0 0.0
    %1474 = vmatpush2.msra.mxu0 %v648
    %1475 = vmatprep.subr.mxu0 0.0
    %1476 = vmatpush2.msra.mxu0 %v639
    %1477 = vmatprep.mubr.f32.mxu0 %v198
    %1478 = vmatmul.mubr.f32.gmra.mxu0 %v197
    %v1479 = vpop.f32.mrf.mxu0
    %v1480 = vadd.f32 %v1410, %v1479
    %v1481 = vpop.f32.mrf.mxu0
    %1482 = vdwg.mxu0
    %1483 = vst [vmem:[#allocation2] sm:$0xff] %v913
    %1484 = vst [vmem:[#allocation2 + $0x8] sm:$0xff] %v915
    %1485 = vst [vmem:[#allocation2 + $0x10] sm:$0xff] %v1055
    %1486 = vst [vmem:[#allocation2 + $0x18] sm:$0xff] %v1057
    %1487 = vst [vmem:[#allocation2 + $0x20] sm:$0xff] %v1197
    %1488 = vst [vmem:[#allocation2 + $0x28] sm:$0xff] %v1199
    %1489 = vst [vmem:[#allocation2 + $0x30] sm:$0xff] %v1339
    %1490 = vst [vmem:[#allocation2 + $0x38] sm:$0xff] %v1341
    %1491 = vst [vmem:[#allocation2 + $0x40] sm:$0xff] %v1480
    %v1492 = vlaneseq
    %v1493 = vshrl.u32 %v1492, 7
    %v1494 = vadd.s32 %v1493, 8
    %v1495 = vadd.s32 %v1493, 16
    %v1496 = vadd.s32 %v1493, 24
    %v1497 = vadd.s32 %v1493, 32
    %v1498 = vadd.s32 %v1493, 40
    %v1499 = vadd.s32 %v1493, 48
    %vm1500 = vcmp.eq.s32.totalorder %v1493, 0
    %vm1501 = vcmp.eq.s32.totalorder %v1494, 0
    %vm1502 = vcmp.eq.s32.totalorder %v1495, 0
    %vm1503 = vcmp.eq.s32.totalorder %v1496, 0
    %vm1504 = vcmp.eq.s32.totalorder %v1497, 0
    %vm1505 = vcmp.eq.s32.totalorder %v1498, 0
    %vm1506 = vcmp.eq.s32.totalorder %v1499, 0
    %v1507 = vsel %vm1500, 1.0, 0.0
    %v1508 = vsel %vm1501, 1.0, 0.0
    %v1509 = vsel %vm1502, 1.0, 0.0
    %v1510 = vsel %vm1503, 1.0, 0.0
    %v1511 = vsel %vm1504, 1.0, 0.0
    %v1512 = vsel %vm1505, 1.0, 0.0
    %v1513 = vsel %vm1506, 1.0, 0.0
    %1514 = vst [vmem:[#allocation2 + $0x48] sm:$0xff] %v1507
    %1515 = vst [vmem:[#allocation2 + $0x50] sm:$0xff] %v1508
    %1516 = vst [vmem:[#allocation2 + $0x58] sm:$0xff] %v1509
    %1517 = vst [vmem:[#allocation2 + $0x60] sm:$0xff] %v1510
    %1518 = vst [vmem:[#allocation2 + $0x68] sm:$0xff] %v1511
    %1519 = vst [vmem:[#allocation2 + $0x70] sm:$0xff] %v1512
    %1520 = vst [vmem:[#allocation2 + $0x78] sm:$0xff] %v1513
    %v1521 = vld [vmem:[%s3] sm:$0xff]
    %v1522 = vld [vmem:[%s3 + $0x8] sm:$0xff]
    %v1523 = vld [vmem:[#allocation2] sm:$0xff]
    %v1524 = vld [vmem:[#allocation2 + $0x8] sm:$0xff]
    %v1525 = vld [vmem:[#allocation2 + $0x10] sm:$0xff]
    %v1526 = vld [vmem:[#allocation2 + $0x18] sm:$0xff]
    %v1527 = vld [vmem:[#allocation2 + $0x20] sm:$0xff]
    %v1528 = vld [vmem:[#allocation2 + $0x28] sm:$0xff]
    %v1529 = vld [vmem:[#allocation2 + $0x30] sm:$0xff]
    %v1530 = vld [vmem:[#allocation2 + $0x38] sm:$0xff]
    %v1531 = vld [vmem:[#allocation2 + $0x40] sm:$0xff]
    %v1532 = vld [vmem:[#allocation2 + $0x48] sm:$0xff]
    %v1533 = vld [vmem:[#allocation2 + $0x50] sm:$0xff]
    %v1534 = vld [vmem:[#allocation2 + $0x58] sm:$0xff]
    %v1535 = vld [vmem:[#allocation2 + $0x60] sm:$0xff]
    %v1536 = vld [vmem:[#allocation2 + $0x68] sm:$0xff]
    %v1537 = vld [vmem:[#allocation2 + $0x70] sm:$0xff]
    %v1538 = vld [vmem:[#allocation2 + $0x78] sm:$0xff]
    %1539 = vmatprep.subr.mxu0 0.0
    %1540 = vmatpush1.msra.mxu0 %v1538
    %1541 = vmatprep.subr.mxu0 0.0
    %1542 = vmatpush1.msra.mxu0 %v1537
    %1543 = vmatprep.subr.mxu0 0.0
    %1544 = vmatpush1.msra.mxu0 %v1536
    %1545 = vmatprep.subr.mxu0 0.0
    %1546 = vmatpush1.msra.mxu0 %v1535
    %1547 = vmatprep.subr.mxu0 0.0
    %1548 = vmatpush1.msra.mxu0 %v1534
    %1549 = vmatprep.subr.mxu0 0.0
    %1550 = vmatpush1.msra.mxu0 %v1533
    %1551 = vmatprep.subr.mxu0 0.0
    %1552 = vmatpush1.msra.mxu0 %v1532
    %1553 = vmatprep.subr.mxu0 0.0
    %1554 = vmatpush1.msra.mxu0 %v1531
    %1555 = vmatprep.subr.mxu0 0.0
    %1556 = vmatpush1.msra.mxu0 %v1530
    %1557 = vmatprep.subr.mxu0 0.0
    %1558 = vmatpush1.msra.mxu0 %v1529
    %1559 = vmatprep.subr.mxu0 0.0
    %1560 = vmatpush1.msra.mxu0 %v1528
    %1561 = vmatprep.subr.mxu0 0.0
    %1562 = vmatpush1.msra.mxu0 %v1527
    %1563 = vmatprep.subr.mxu0 0.0
    %1564 = vmatpush1.msra.mxu0 %v1526
    %1565 = vmatprep.subr.mxu0 0.0
    %1566 = vmatpush1.msra.mxu0 %v1525
    %1567 = vmatprep.subr.mxu0 0.0
    %1568 = vmatpush1.msra.mxu0 %v1524
    %1569 = vmatprep.subr.mxu0 0.0
    %1570 = vmatpush1.msra.mxu0 %v1523
    %1571 = vmatprep.subr.mxu0 0.0
    %1572 = vmatpush2.msra.mxu0 0.0
    %1573 = vmatprep.subr.mxu0 0.0
    %1574 = vmatpush2.msra.mxu0 0.0
    %1575 = vmatprep.subr.mxu0 0.0
    %1576 = vmatpush2.msra.mxu0 0.0
    %1577 = vmatprep.subr.mxu0 0.0
    %1578 = vmatpush2.msra.mxu0 0.0
    %1579 = vmatprep.subr.mxu0 0.0
    %1580 = vmatpush2.msra.mxu0 0.0
    %1581 = vmatprep.subr.mxu0 0.0
    %1582 = vmatpush2.msra.mxu0 0.0
    %1583 = vmatprep.subr.mxu0 0.0
    %1584 = vmatpush2.msra.mxu0 0.0
    %1585 = vmatprep.subr.mxu0 0.0
    %1586 = vmatpush2.msra.mxu0 0.0
    %1587 = vmatprep.subr.mxu0 0.0
    %1588 = vmatpush2.msra.mxu0 0.0
    %1589 = vmatprep.subr.mxu0 0.0
    %1590 = vmatpush2.msra.mxu0 0.0
    %1591 = vmatprep.subr.mxu0 0.0
    %1592 = vmatpush2.msra.mxu0 0.0
    %1593 = vmatprep.subr.mxu0 0.0
    %1594 = vmatpush2.msra.mxu0 0.0
    %1595 = vmatprep.subr.mxu0 0.0
    %1596 = vmatpush2.msra.mxu0 0.0
    %1597 = vmatprep.subr.mxu0 0.0
    %1598 = vmatpush2.msra.mxu0 0.0
    %1599 = vmatprep.subr.mxu0 0.0
    %1600 = vmatpush2.msra.mxu0 0.0
    %1601 = vmatprep.subr.mxu0 0.0
    %1602 = vmatpush2.msra.mxu0 0.0
    %1603 = vmatprep.mubr.f32.mxu0 0.0
    %1604 = vmatmul.mubr.f32.gmra.mxu0 %v1521
    %v1605 = vpop.f32.mrf.mxu0
    %v1606 = vadd.f32 0.0, %v1605
    %v1607 = vpop.f32.mrf.mxu0
    %1608 = vmatprep.mubr.f32.mxu0 0.0
    %1609 = vmatmul.mubr.f32.gmra.mxu0 %v1522
    %v1610 = vpop.f32.mrf.mxu0
    %v1611 = vadd.f32 0.0, %v1610
    %v1612 = vpop.f32.mrf.mxu0
    %1613 = vdwg.mxu0
    %v1614 = vmax.f32 %v1606, 0.0
    %v1615 = vmax.f32 %v1611, 0.0
    %1616 = vst [vmem:[%s4] sm:$0xff] %v1614
    %1617 = vst [vmem:[%s4 + $0x8] sm:$0xff] %v1615
    // Predicated region
    $region22: #{extra_conv_forward.1} parent=1 // pred_check
      _
    $region23: #{extra_conv_forward.1} parent=1 // pred_check_branch
      %1619 = sbr.rel (0) target = $region25
    $region24: #{extra_conv_forward.1} parent=1 // pred_region
      _
    $region25: #{extra_conv_forward.1} parent=1 // pred_fallthru
      _
    // Predicated region
    $region26: #{extra_conv_forward.1} parent=1 // pred_check
      _
    $region27: #{extra_conv_forward.1} parent=1 // pred_check_branch
      %1621 = sbr.rel (0) target = $region29
    $region28: #{extra_conv_forward.1} parent=1 // pred_region
      _
    $region29: #{extra_conv_forward.1} parent=1 // pred_fallthru
      _
    %1622 = vsyncpa [#allocation4], 1

</llo_original>
